<compile_context>
chip_gen: v6e
topology: v6e:2x2x1
jax: 0.10.0
libtpu: 0.0.40
codegen_flags: <defaults>
</compile_context>

<pallas_src>
import math

import jax
import jax.numpy as jnp
import numpy as np
from jax import lax
from jax.experimental import pallas as pl
from jax.experimental.pallas import tpu as pltpu


# ----------------------------- fused Pallas kernel -----------------------------

def _make_fused_kernel(B, L, Cin, H, num_layers, num_classes):
    """Single fused CLDNN forward kernel (no grid, all operands VMEM-resident)."""
    assert L % 4 == 0, "two MaxPool1d(2) stages require L % 4 == 0"
    L1 = L // 2          # length after first max-pool
    T = L1 // 2          # length after second max-pool == LSTM sequence length
    C1, C2 = 64, 128     # conv channel counts (fixed by the PyTorch module)
    f32 = jnp.float32

    def kernel(*refs):
        x_ref, w1_ref, b1_ref, w2_ref, b2_ref = refs[:5]
        lstm_refs = refs[5:5 + 3 * num_layers]
        fc1w_ref, fc1b_ref, fc2w_ref, fc2b_ref = refs[5 + 3 * num_layers:5 + 3 * num_layers + 4]
        out_ref = refs[-1]

        # ---------------- conv block 1: Conv1d(Cin->64,k=3,pad=1) + ReLU + MaxPool(2) ---------
        x = x_ref[...].astype(f32)                               # (B, L, Cin)
        zr = jnp.zeros((B, 1, Cin), f32)
        xp = jnp.concatenate([zr, x, zr], axis=1)                # padding=1, done in VMEM
        # batch folded into M: (B*L, Cin) @ (Cin, 64) per tap, 3 static taps accumulated
        acc1 = jnp.zeros((B * L, C1), f32)
        for k in range(3):
            tap = xp[:, k:k + L, :].reshape(B * L, Cin)
            acc1 = acc1 + jnp.dot(tap, w1_ref[k], preferred_element_type=f32)
        a1 = jnp.maximum(acc1 + b1_ref[...], 0.0)                # bias + ReLU  (B*L, 64)
        p1 = jnp.max(a1.reshape(B * L1, 2, C1), axis=1)          # MaxPool1d(2) (B*L1, 64)

        # ---------------- conv block 2: Conv1d(64->128,k=3,pad=1) + ReLU + MaxPool(2) ---------
        h1 = p1.reshape(B, L1, C1)
        zr1 = jnp.zeros((B, 1, C1), f32)
        h1p = jnp.concatenate([zr1, h1, zr1], axis=1)            # (B, L1+2, 64)
        # im2col: one matmul (B*L1, 3*64) @ (3*64, 128) instead of 3 accumulated taps
        cols = jnp.concatenate(
            [h1p[:, 0:L1, :], h1p[:, 1:L1 + 1, :], h1p[:, 2:L1 + 2, :]], axis=-1)  # (B, L1, 192)
        a2 = jnp.dot(cols.reshape(B * L1, 3 * C1), w2_ref[...],
                     preferred_element_type=f32) + b2_ref[...]
        a2 = jnp.maximum(a2, 0.0)                                # (B*L1, 128)
        p2 = jnp.max(a2.reshape(B * T, 2, C2), axis=1)           # (B*T, 128)

        # ---------------- LSTM stack (batch_first in PyTorch; gate order i, f, g, o) ----------
        x3 = p2.reshape(B, T, C2)
        x_steps = [x3[:, t, :] for t in range(T)]                # list of T x (B, F)
        h = None
        for l in range(num_layers):
            wih = lstm_refs[3 * l][...]                          # (F, 4H)
            whh = lstm_refs[3 * l + 1][...]                      # (H, 4H)
            bias = lstm_refs[3 * l + 2][...]                     # (1, 4H) = b_ih + b_hh
            # hoisted input projection: one matmul over all T timesteps (time-major rows)
            x_cat = jnp.concatenate(x_steps, axis=0)             # (T*B, F)
            gates_x = jnp.dot(x_cat, wih, preferred_element_type=f32) + bias  # (T*B, 4H)
            h = jnp.zeros((B, H), f32)
            c = jnp.zeros((B, H), f32)
            outs = []
            for t in range(T):                                   # fully unrolled recurrence
                gates = gates_x[t * B:(t + 1) * B, :] + jnp.dot(
                    h, whh, preferred_element_type=f32)          # (B, 4H)
                # full-width EUP sigmoid/tanh, then lane sub-slices for i/f/g/o
                sg = jax.nn.sigmoid(gates)
                tg = jnp.tanh(gates)
                c = sg[:, H:2 * H] * c + sg[:, 0:H] * tg[:, 2 * H:3 * H]   # f*c + i*g
                h = sg[:, 3 * H:4 * H] * jnp.tanh(c)                       # o*tanh(c)
                if l + 1 < num_layers:
                    outs.append(h)                               # last layer: only final h needed
            x_steps = outs

        # ---------------- FC head fused: Linear(H,64) + ReLU + Linear(64,num_classes) ---------
        z = jnp.dot(h, fc1w_ref[...], preferred_element_type=f32) + fc1b_ref[...]
        z = jnp.maximum(z, 0.0)
        y = jnp.dot(z, fc2w_ref[...], preferred_element_type=f32) + fc2b_ref[...]
        out_ref[...] = y.astype(out_ref.dtype)

    return kernel


def cldnn_forward(prepped, x_ncl, lstm_hidden_size, lstm_num_layers, num_classes):
    """Fused forward. x_ncl: (B, Cin, L) — same layout PyTorch expects."""
    B, Cin, L = x_ncl.shape
    H = lstm_hidden_size
    x_nlc = jnp.transpose(x_ncl, (0, 2, 1))                      # one-time NCL -> NLC

    args = [x_nlc, prepped["conv1_w"], prepped["conv1_b"],
            prepped["conv2_w"], prepped["conv2_b"]]
    for l in range(lstm_num_layers):
        args += [prepped[f"lstm_wih_{l}"], prepped[f"lstm_whh_{l}"], prepped[f"lstm_b_{l}"]]
    args += [prepped["fc1_w"], prepped["fc1_b"], prepped["fc2_w"], prepped["fc2_b"]]

    kernel = _make_fused_kernel(B, L, Cin, H, lstm_num_layers, num_classes)
    vmem = lambda: pl.BlockSpec(memory_space=pltpu.MemorySpace.VMEM)
    return pl.pallas_call(
        kernel,
        out_shape=jax.ShapeDtypeStruct((B, num_classes), x_ncl.dtype),
        in_specs=[vmem() for _ in args],                         # whole arrays, VMEM-resident
        out_specs=vmem(),
    )(*args)


# ----------------------------- parameters -----------------------------

def init_params(key, input_channels, lstm_hidden_size, lstm_num_layers, num_classes):
    """Deterministic parameter init mirroring PyTorch default shapes."""
    def u(k, shape, bound):
        return jax.random.uniform(k, shape, jnp.float32, -bound, bound)

    keys = iter(jax.random.split(key, 8 + 4 * lstm_num_layers))
    p = {}
    b1 = 1.0 / math.sqrt(input_channels * 3)
    p["conv1_w"] = u(next(keys), (64, input_channels, 3), b1)
    p["conv1_b"] = u(next(keys), (64,), b1)
    b2 = 1.0 / math.sqrt(64 * 3)
    p["conv2_w"] = u(next(keys), (128, 64, 3), b2)
    p["conv2_b"] = u(next(keys), (128,), b2)
    H = lstm_hidden_size
    bl = 1.0 / math.sqrt(H)
    for l in range(lstm_num_layers):
        in_size = 128 if l == 0 else H
        p[f"lstm_wih_{l}"] = u(next(keys), (4 * H, in_size), bl)
        p[f"lstm_whh_{l}"] = u(next(keys), (4 * H, H), bl)
        p[f"lstm_bih_{l}"] = u(next(keys), (4 * H,), bl)
        p[f"lstm_bhh_{l}"] = u(next(keys), (4 * H,), bl)
    bf1 = 1.0 / math.sqrt(H)
    p["fc1_w"] = u(next(keys), (64, H), bf1)
    p["fc1_b"] = u(next(keys), (64,), bf1)
    bf2 = 1.0 / math.sqrt(64)
    p["fc2_w"] = u(next(keys), (num_classes, 64), bf2)
    p["fc2_b"] = u(next(keys), (num_classes,), bf2)
    return p


def prepare_params(params, lstm_num_layers):
    """One-time re-layout of PyTorch-shaped weights into kernel layouts."""
    p = {}
    p["conv1_w"] = jnp.transpose(params["conv1_w"], (2, 1, 0))            # (K, Cin, 64)
    p["conv1_b"] = params["conv1_b"][None, :]                             # (1, 64)
    w2 = jnp.transpose(params["conv2_w"], (2, 1, 0))                      # (K, 64, 128)
    p["conv2_w"] = w2.reshape(3 * 64, 128)                                # im2col weight (192, 128)
    p["conv2_b"] = params["conv2_b"][None, :]                             # (1, 128)
    for l in range(lstm_num_layers):
        p[f"lstm_wih_{l}"] = params[f"lstm_wih_{l}"].T                    # (F, 4H)
        p[f"lstm_whh_{l}"] = params[f"lstm_whh_{l}"].T                    # (H, 4H)
        p[f"lstm_b_{l}"] = (params[f"lstm_bih_{l}"] + params[f"lstm_bhh_{l}"])[None, :]
    p["fc1_w"] = params["fc1_w"].T                                        # (H, 64)
    p["fc1_b"] = params["fc1_b"][None, :]
    p["fc2_w"] = params["fc2_w"].T                                        # (64, C)
    p["fc2_b"] = params["fc2_b"][None, :]
    return p


# ----------------------------- pure-JAX reference -----------------------------

def reference_forward(params, x_ncl, lstm_num_layers):
    def conv1d(x, w, b):
        y = lax.conv_general_dilated(x, w, (1,), [(1, 1)],
                                     dimension_numbers=("NCH", "OIH", "NCH"))
        return y + b[None, :, None]

    x = jnp.maximum(conv1d(x_ncl, params["conv1_w"], params["conv1_b"]), 0.0)
    x = jnp.max(x.reshape(x.shape[0], x.shape[1], x.shape[2] // 2, 2), axis=-1)
    x = jnp.maximum(conv1d(x, params["conv2_w"], params["conv2_b"]), 0.0)
    x = jnp.max(x.reshape(x.shape[0], x.shape[1], x.shape[2] // 2, 2), axis=-1)
    x = jnp.transpose(x, (0, 2, 1))                               # (B, T, 128)

    B = x.shape[0]
    h_seq = x
    for l in range(lstm_num_layers):
        wih = params[f"lstm_wih_{l}"]
        whh = params[f"lstm_whh_{l}"]
        b = params[f"lstm_bih_{l}"] + params[f"lstm_bhh_{l}"]
        H = whh.shape[1]

        def step(carry, x_t):
            h, c = carry
            gates = x_t @ wih.T + h @ whh.T + b
            i, f, g, o = jnp.split(gates, 4, axis=-1)
            c = jax.nn.sigmoid(f) * c + jax.nn.sigmoid(i) * jnp.tanh(g)
            h = jax.nn.sigmoid(o) * jnp.tanh(c)
            return (h, c), h

        init = (jnp.zeros((B, H), jnp.float32), jnp.zeros((B, H), jnp.float32))
        _, hs = lax.scan(step, init, jnp.transpose(h_seq, (1, 0, 2)))
        h_seq = jnp.transpose(hs, (1, 0, 2))

    last = h_seq[:, -1, :]
    z = jnp.maximum(last @ params["fc1_w"].T + params["fc1_b"], 0.0)
    return z @ params["fc2_w"].T + params["fc2_b"]


# ----------------------------- main -----------------------------

if __name__ == "__main__":
    B, Cin, L = 2, 4, 16
    lstm_hidden_size, lstm_num_layers, num_classes = 32, 2, 8

    key = jax.random.PRNGKey(0)
    pkey, xkey = jax.random.split(key)
    params = init_params(pkey, Cin, lstm_hidden_size, lstm_num_layers, num_classes)
    x = jax.random.normal(xkey, (B, Cin, L), jnp.float32)         # PyTorch NCL input

    prepped = prepare_params(params, lstm_num_layers)             # one-time weight re-layout

    fwd = jax.jit(lambda pp, xin: cldnn_forward(
        pp, xin, lstm_hidden_size, lstm_num_layers, num_classes))
    out = jax.block_until_ready(fwd(prepped, x))

    ref = jax.block_until_ready(reference_forward(params, x, lstm_num_layers))
    assert out.shape == (B, num_classes), out.shape
    np.testing.assert_allclose(np.asarray(out), np.asarray(ref), rtol=2e-3, atol=2e-3)

    print("KERNEL_OK")
</pallas_src>

<mosaic_0001>
module attributes {stable_mosaic.version = 11 : i64} {
  func.func @kernel(%arg0: memref<2x16x4xf32, #tpu.memory_space<vmem>>, %arg1: memref<3x4x64xf32, #tpu.memory_space<vmem>>, %arg2: memref<1x64xf32, #tpu.memory_space<vmem>>, %arg3: memref<192x128xf32, #tpu.memory_space<vmem>>, %arg4: memref<1x128xf32, #tpu.memory_space<vmem>>, %arg5: memref<128x128xf32, #tpu.memory_space<vmem>>, %arg6: memref<32x128xf32, #tpu.memory_space<vmem>>, %arg7: memref<1x128xf32, #tpu.memory_space<vmem>>, %arg8: memref<32x128xf32, #tpu.memory_space<vmem>>, %arg9: memref<32x128xf32, #tpu.memory_space<vmem>>, %arg10: memref<1x128xf32, #tpu.memory_space<vmem>>, %arg11: memref<32x64xf32, #tpu.memory_space<vmem>>, %arg12: memref<1x64xf32, #tpu.memory_space<vmem>>, %arg13: memref<64x8xf32, #tpu.memory_space<vmem>>, %arg14: memref<1x8xf32, #tpu.memory_space<vmem>>, %arg15: memref<2x8xf32, #tpu.memory_space<vmem>>) attributes {dimension_semantics = [], scalar_prefetch = 0 : i64, scratch_operands = 0 : i64, tpu.core_type = #tpu.core_type<tc>} {
    %c0 = arith.constant 0 : index
    %c0_0 = arith.constant 0 : index
    %c0_1 = arith.constant 0 : index
    %0 = vector.load %arg0[%c0, %c0_0, %c0_1] : memref<2x16x4xf32, #tpu.memory_space<vmem>>, vector<2x16x4xf32>
    %cst = arith.constant 0.000000e+00 : f32
    %1 = vector.broadcast %cst : f32 to vector<2x1x4xf32>
    %2 = tpu.concatenate %1, %0, %1 in 1 : vector<2x1x4xf32>, vector<2x16x4xf32>, vector<2x1x4xf32> -> vector<2x18x4xf32>
    %cst_2 = arith.constant 0.000000e+00 : f32
    %3 = vector.broadcast %cst_2 : f32 to vector<32x64xf32>
    %4 = vector.extract_strided_slice %2 {offsets = [0, 0, 0], sizes = [2, 16, 4], strides = [1, 1, 1]} : vector<2x18x4xf32> to vector<2x16x4xf32>
    %5 = vector.shape_cast %4 : vector<2x16x4xf32> to vector<32x4xf32>
    %c0_3 = arith.constant 0 : index
    %c0_4 = arith.constant 0 : index
    %c0_5 = arith.constant 0 : index
    %6 = vector.load %arg1[%c0_3, %c0_4, %c0_5] : memref<3x4x64xf32, #tpu.memory_space<vmem>>, vector<1x4x64xf32>
    %7 = vector.shape_cast %6 : vector<1x4x64xf32> to vector<4x64xf32>
    %cst_6 = arith.constant dense<0.000000e+00> : vector<32x64xf32>
    %8 = tpu.matmul %5, %7, %cst_6 {dimension_numbers = #tpu.dot_dimension_numbers<[1], [0], [0], [1], [0, 0, 1, 1], [], []>} : vector<32x4xf32>, vector<4x64xf32>, vector<32x64xf32> -> vector<32x64xf32>
    %9 = arith.addf %3, %8 : vector<32x64xf32>
    %10 = vector.extract_strided_slice %2 {offsets = [0, 1, 0], sizes = [2, 16, 4], strides = [1, 1, 1]} : vector<2x18x4xf32> to vector<2x16x4xf32>
    %11 = vector.shape_cast %10 : vector<2x16x4xf32> to vector<32x4xf32>
    %c1 = arith.constant 1 : index
    %c0_7 = arith.constant 0 : index
    %c0_8 = arith.constant 0 : index
    %12 = vector.load %arg1[%c1, %c0_7, %c0_8] : memref<3x4x64xf32, #tpu.memory_space<vmem>>, vector<1x4x64xf32>
    %13 = vector.shape_cast %12 : vector<1x4x64xf32> to vector<4x64xf32>
    %cst_9 = arith.constant dense<0.000000e+00> : vector<32x64xf32>
    %14 = tpu.matmul %11, %13, %cst_9 {dimension_numbers = #tpu.dot_dimension_numbers<[1], [0], [0], [1], [0, 0, 1, 1], [], []>} : vector<32x4xf32>, vector<4x64xf32>, vector<32x64xf32> -> vector<32x64xf32>
    %15 = arith.addf %9, %14 : vector<32x64xf32>
    %16 = vector.extract_strided_slice %2 {offsets = [0, 2, 0], sizes = [2, 16, 4], strides = [1, 1, 1]} : vector<2x18x4xf32> to vector<2x16x4xf32>
    %17 = vector.shape_cast %16 : vector<2x16x4xf32> to vector<32x4xf32>
    %c2 = arith.constant 2 : index
    %c0_10 = arith.constant 0 : index
    %c0_11 = arith.constant 0 : index
    %18 = vector.load %arg1[%c2, %c0_10, %c0_11] : memref<3x4x64xf32, #tpu.memory_space<vmem>>, vector<1x4x64xf32>
    %19 = vector.shape_cast %18 : vector<1x4x64xf32> to vector<4x64xf32>
    %cst_12 = arith.constant dense<0.000000e+00> : vector<32x64xf32>
    %20 = tpu.matmul %17, %19, %cst_12 {dimension_numbers = #tpu.dot_dimension_numbers<[1], [0], [0], [1], [0, 0, 1, 1], [], []>} : vector<32x4xf32>, vector<4x64xf32>, vector<32x64xf32> -> vector<32x64xf32>
    %21 = arith.addf %15, %20 : vector<32x64xf32>
    %c0_13 = arith.constant 0 : index
    %c0_14 = arith.constant 0 : index
    %22 = vector.load %arg2[%c0_13, %c0_14] : memref<1x64xf32, #tpu.memory_space<vmem>>, vector<1x64xf32>
    %23 = vector.broadcast %22 : vector<1x64xf32> to vector<32x64xf32>
    %24 = arith.addf %21, %23 : vector<32x64xf32>
    %cst_15 = arith.constant 0.000000e+00 : f32
    %25 = vector.broadcast %cst_15 : f32 to vector<32x64xf32>
    %26 = arith.maximumf %24, %25 : vector<32x64xf32>
    %27 = vector.shape_cast %26 : vector<32x64xf32> to vector<16x2x64xf32>
    %cst_16 = arith.constant dense<0xFF800000> : vector<16x64xf32>
    %28 = vector.multi_reduction <maximumf>, %27, %cst_16 [1] : vector<16x2x64xf32> to vector<16x64xf32>
    %29 = vector.shape_cast %28 : vector<16x64xf32> to vector<2x8x64xf32>
    %cst_17 = arith.constant 0.000000e+00 : f32
    %30 = vector.broadcast %cst_17 : f32 to vector<2x1x64xf32>
    %31 = tpu.concatenate %30, %29, %30 in 1 : vector<2x1x64xf32>, vector<2x8x64xf32>, vector<2x1x64xf32> -> vector<2x10x64xf32>
    %32 = vector.extract_strided_slice %31 {offsets = [0, 0, 0], sizes = [2, 8, 64], strides = [1, 1, 1]} : vector<2x10x64xf32> to vector<2x8x64xf32>
    %33 = vector.extract_strided_slice %31 {offsets = [0, 1, 0], sizes = [2, 8, 64], strides = [1, 1, 1]} : vector<2x10x64xf32> to vector<2x8x64xf32>
    %34 = vector.extract_strided_slice %31 {offsets = [0, 2, 0], sizes = [2, 8, 64], strides = [1, 1, 1]} : vector<2x10x64xf32> to vector<2x8x64xf32>
    %35 = tpu.concatenate %32, %33, %34 in 2 : vector<2x8x64xf32>, vector<2x8x64xf32>, vector<2x8x64xf32> -> vector<2x8x192xf32>
    %36 = vector.shape_cast %35 : vector<2x8x192xf32> to vector<16x192xf32>
    %c0_18 = arith.constant 0 : index
    %c0_19 = arith.constant 0 : index
    %37 = vector.load %arg3[%c0_18, %c0_19] : memref<192x128xf32, #tpu.memory_space<vmem>>, vector<192x128xf32>
    %cst_20 = arith.constant dense<0.000000e+00> : vector<16x128xf32>
    %38 = tpu.matmul %36, %37, %cst_20 {dimension_numbers = #tpu.dot_dimension_numbers<[1], [0], [0], [1], [0, 0, 1, 1], [], []>} : vector<16x192xf32>, vector<192x128xf32>, vector<16x128xf32> -> vector<16x128xf32>
    %c0_21 = arith.constant 0 : index
    %c0_22 = arith.constant 0 : index
    %39 = vector.load %arg4[%c0_21, %c0_22] : memref<1x128xf32, #tpu.memory_space<vmem>>, vector<1x128xf32>
    %40 = vector.broadcast %39 : vector<1x128xf32> to vector<16x128xf32>
    %41 = arith.addf %38, %40 : vector<16x128xf32>
    %cst_23 = arith.constant 0.000000e+00 : f32
    %42 = vector.broadcast %cst_23 : f32 to vector<16x128xf32>
    %43 = arith.maximumf %41, %42 : vector<16x128xf32>
    %44 = vector.shape_cast %43 : vector<16x128xf32> to vector<8x2x128xf32>
    %cst_24 = arith.constant dense<0xFF800000> : vector<8x128xf32>
    %45 = vector.multi_reduction <maximumf>, %44, %cst_24 [1] : vector<8x2x128xf32> to vector<8x128xf32>
    %46 = vector.shape_cast %45 : vector<8x128xf32> to vector<2x4x128xf32>
    %47 = vector.extract_strided_slice %46 {offsets = [0, 0, 0], sizes = [2, 1, 128], strides = [1, 1, 1]} : vector<2x4x128xf32> to vector<2x1x128xf32>
    %48 = vector.shape_cast %47 : vector<2x1x128xf32> to vector<2x128xf32>
    %49 = vector.extract_strided_slice %46 {offsets = [0, 1, 0], sizes = [2, 1, 128], strides = [1, 1, 1]} : vector<2x4x128xf32> to vector<2x1x128xf32>
    %50 = vector.shape_cast %49 : vector<2x1x128xf32> to vector<2x128xf32>
    %51 = vector.extract_strided_slice %46 {offsets = [0, 2, 0], sizes = [2, 1, 128], strides = [1, 1, 1]} : vector<2x4x128xf32> to vector<2x1x128xf32>
    %52 = vector.shape_cast %51 : vector<2x1x128xf32> to vector<2x128xf32>
    %53 = vector.extract_strided_slice %46 {offsets = [0, 3, 0], sizes = [2, 1, 128], strides = [1, 1, 1]} : vector<2x4x128xf32> to vector<2x1x128xf32>
    %54 = vector.shape_cast %53 : vector<2x1x128xf32> to vector<2x128xf32>
    %c0_25 = arith.constant 0 : index
    %c0_26 = arith.constant 0 : index
    %55 = vector.load %arg5[%c0_25, %c0_26] : memref<128x128xf32, #tpu.memory_space<vmem>>, vector<128x128xf32>
    %c0_27 = arith.constant 0 : index
    %c0_28 = arith.constant 0 : index
    %56 = vector.load %arg6[%c0_27, %c0_28] : memref<32x128xf32, #tpu.memory_space<vmem>>, vector<32x128xf32>
    %c0_29 = arith.constant 0 : index
    %c0_30 = arith.constant 0 : index
    %57 = vector.load %arg7[%c0_29, %c0_30] : memref<1x128xf32, #tpu.memory_space<vmem>>, vector<1x128xf32>
    %58 = tpu.concatenate %48, %50, %52, %54 in 0 : vector<2x128xf32>, vector<2x128xf32>, vector<2x128xf32>, vector<2x128xf32> -> vector<8x128xf32>
    %cst_31 = arith.constant dense<0.000000e+00> : vector<8x128xf32>
    %59 = tpu.matmul %58, %55, %cst_31 {dimension_numbers = #tpu.dot_dimension_numbers<[1], [0], [0], [1], [0, 0, 1, 1], [], []>} : vector<8x128xf32>, vector<128x128xf32>, vector<8x128xf32> -> vector<8x128xf32>
    %60 = vector.broadcast %57 : vector<1x128xf32> to vector<8x128xf32>
    %61 = arith.addf %59, %60 : vector<8x128xf32>
    %cst_32 = arith.constant 0.000000e+00 : f32
    %62 = vector.broadcast %cst_32 : f32 to vector<2x32xf32>
    %cst_33 = arith.constant 0.000000e+00 : f32
    %63 = vector.broadcast %cst_33 : f32 to vector<2x32xf32>
    %64 = vector.extract_strided_slice %61 {offsets = [0, 0], sizes = [2, 128], strides = [1, 1]} : vector<8x128xf32> to vector<2x128xf32>
    %cst_34 = arith.constant dense<0.000000e+00> : vector<2x128xf32>
    %65 = tpu.matmul %62, %56, %cst_34 {dimension_numbers = #tpu.dot_dimension_numbers<[1], [0], [0], [1], [0, 0, 1, 1], [], []>} : vector<2x32xf32>, vector<32x128xf32>, vector<2x128xf32> -> vector<2x128xf32>
    %66 = arith.addf %64, %65 : vector<2x128xf32>
    %67 = arith.negf %66 : vector<2x128xf32>
    %68 = math.exp %67 : vector<2x128xf32>
    %cst_35 = arith.constant 1.000000e+00 : f32
    %69 = vector.broadcast %cst_35 : f32 to vector<2x128xf32>
    %70 = arith.addf %69, %68 : vector<2x128xf32>
    %71 = arith.divf %69, %70 : vector<2x128xf32>
    %72 = math.tanh %66 : vector<2x128xf32>
    %73 = vector.extract_strided_slice %71 {offsets = [0, 32], sizes = [2, 32], strides = [1, 1]} : vector<2x128xf32> to vector<2x32xf32>
    %74 = arith.mulf %73, %63 : vector<2x32xf32>
    %75 = vector.extract_strided_slice %71 {offsets = [0, 0], sizes = [2, 32], strides = [1, 1]} : vector<2x128xf32> to vector<2x32xf32>
    %76 = vector.extract_strided_slice %72 {offsets = [0, 64], sizes = [2, 32], strides = [1, 1]} : vector<2x128xf32> to vector<2x32xf32>
    %77 = arith.mulf %75, %76 : vector<2x32xf32>
    %78 = arith.addf %74, %77 : vector<2x32xf32>
    %79 = vector.extract_strided_slice %71 {offsets = [0, 96], sizes = [2, 32], strides = [1, 1]} : vector<2x128xf32> to vector<2x32xf32>
    %80 = math.tanh %78 : vector<2x32xf32>
    %81 = arith.mulf %79, %80 : vector<2x32xf32>
    %82 = vector.extract_strided_slice %61 {offsets = [2, 0], sizes = [2, 128], strides = [1, 1]} : vector<8x128xf32> to vector<2x128xf32>
    %cst_36 = arith.constant dense<0.000000e+00> : vector<2x128xf32>
    %83 = tpu.matmul %81, %56, %cst_36 {dimension_numbers = #tpu.dot_dimension_numbers<[1], [0], [0], [1], [0, 0, 1, 1], [], []>} : vector<2x32xf32>, vector<32x128xf32>, vector<2x128xf32> -> vector<2x128xf32>
    %84 = arith.addf %82, %83 : vector<2x128xf32>
    %85 = arith.negf %84 : vector<2x128xf32>
    %86 = math.exp %85 : vector<2x128xf32>
    %cst_37 = arith.constant 1.000000e+00 : f32
    %87 = vector.broadcast %cst_37 : f32 to vector<2x128xf32>
    %88 = arith.addf %87, %86 : vector<2x128xf32>
    %89 = arith.divf %87, %88 : vector<2x128xf32>
    %90 = math.tanh %84 : vector<2x128xf32>
    %91 = vector.extract_strided_slice %89 {offsets = [0, 32], sizes = [2, 32], strides = [1, 1]} : vector<2x128xf32> to vector<2x32xf32>
    %92 = arith.mulf %91, %78 : vector<2x32xf32>
    %93 = vector.extract_strided_slice %89 {offsets = [0, 0], sizes = [2, 32], strides = [1, 1]} : vector<2x128xf32> to vector<2x32xf32>
    %94 = vector.extract_strided_slice %90 {offsets = [0, 64], sizes = [2, 32], strides = [1, 1]} : vector<2x128xf32> to vector<2x32xf32>
    %95 = arith.mulf %93, %94 : vector<2x32xf32>
    %96 = arith.addf %92, %95 : vector<2x32xf32>
    %97 = vector.extract_strided_slice %89 {offsets = [0, 96], sizes = [2, 32], strides = [1, 1]} : vector<2x128xf32> to vector<2x32xf32>
    %98 = math.tanh %96 : vector<2x32xf32>
    %99 = arith.mulf %97, %98 : vector<2x32xf32>
    %100 = vector.extract_strided_slice %61 {offsets = [4, 0], sizes = [2, 128], strides = [1, 1]} : vector<8x128xf32> to vector<2x128xf32>
    %cst_38 = arith.constant dense<0.000000e+00> : vector<2x128xf32>
    %101 = tpu.matmul %99, %56, %cst_38 {dimension_numbers = #tpu.dot_dimension_numbers<[1], [0], [0], [1], [0, 0, 1, 1], [], []>} : vector<2x32xf32>, vector<32x128xf32>, vector<2x128xf32> -> vector<2x128xf32>
    %102 = arith.addf %100, %101 : vector<2x128xf32>
    %103 = arith.negf %102 : vector<2x128xf32>
    %104 = math.exp %103 : vector<2x128xf32>
    %cst_39 = arith.constant 1.000000e+00 : f32
    %105 = vector.broadcast %cst_39 : f32 to vector<2x128xf32>
    %106 = arith.addf %105, %104 : vector<2x128xf32>
    %107 = arith.divf %105, %106 : vector<2x128xf32>
    %108 = math.tanh %102 : vector<2x128xf32>
    %109 = vector.extract_strided_slice %107 {offsets = [0, 32], sizes = [2, 32], strides = [1, 1]} : vector<2x128xf32> to vector<2x32xf32>
    %110 = arith.mulf %109, %96 : vector<2x32xf32>
    %111 = vector.extract_strided_slice %107 {offsets = [0, 0], sizes = [2, 32], strides = [1, 1]} : vector<2x128xf32> to vector<2x32xf32>
    %112 = vector.extract_strided_slice %108 {offsets = [0, 64], sizes = [2, 32], strides = [1, 1]} : vector<2x128xf32> to vector<2x32xf32>
    %113 = arith.mulf %111, %112 : vector<2x32xf32>
    %114 = arith.addf %110, %113 : vector<2x32xf32>
    %115 = vector.extract_strided_slice %107 {offsets = [0, 96], sizes = [2, 32], strides = [1, 1]} : vector<2x128xf32> to vector<2x32xf32>
    %116 = math.tanh %114 : vector<2x32xf32>
    %117 = arith.mulf %115, %116 : vector<2x32xf32>
    %118 = vector.extract_strided_slice %61 {offsets = [6, 0], sizes = [2, 128], strides = [1, 1]} : vector<8x128xf32> to vector<2x128xf32>
    %cst_40 = arith.constant dense<0.000000e+00> : vector<2x128xf32>
    %119 = tpu.matmul %117, %56, %cst_40 {dimension_numbers = #tpu.dot_dimension_numbers<[1], [0], [0], [1], [0, 0, 1, 1], [], []>} : vector<2x32xf32>, vector<32x128xf32>, vector<2x128xf32> -> vector<2x128xf32>
    %120 = arith.addf %118, %119 : vector<2x128xf32>
    %121 = arith.negf %120 : vector<2x128xf32>
    %122 = math.exp %121 : vector<2x128xf32>
    %cst_41 = arith.constant 1.000000e+00 : f32
    %123 = vector.broadcast %cst_41 : f32 to vector<2x128xf32>
    %124 = arith.addf %123, %122 : vector<2x128xf32>
    %125 = arith.divf %123, %124 : vector<2x128xf32>
    %126 = math.tanh %120 : vector<2x128xf32>
    %127 = vector.extract_strided_slice %125 {offsets = [0, 32], sizes = [2, 32], strides = [1, 1]} : vector<2x128xf32> to vector<2x32xf32>
    %128 = arith.mulf %127, %114 : vector<2x32xf32>
    %129 = vector.extract_strided_slice %125 {offsets = [0, 0], sizes = [2, 32], strides = [1, 1]} : vector<2x128xf32> to vector<2x32xf32>
    %130 = vector.extract_strided_slice %126 {offsets = [0, 64], sizes = [2, 32], strides = [1, 1]} : vector<2x128xf32> to vector<2x32xf32>
    %131 = arith.mulf %129, %130 : vector<2x32xf32>
    %132 = arith.addf %128, %131 : vector<2x32xf32>
    %133 = vector.extract_strided_slice %125 {offsets = [0, 96], sizes = [2, 32], strides = [1, 1]} : vector<2x128xf32> to vector<2x32xf32>
    %134 = math.tanh %132 : vector<2x32xf32>
    %135 = arith.mulf %133, %134 : vector<2x32xf32>
    %c0_42 = arith.constant 0 : index
    %c0_43 = arith.constant 0 : index
    %136 = vector.load %arg8[%c0_42, %c0_43] : memref<32x128xf32, #tpu.memory_space<vmem>>, vector<32x128xf32>
    %c0_44 = arith.constant 0 : index
    %c0_45 = arith.constant 0 : index
    %137 = vector.load %arg9[%c0_44, %c0_45] : memref<32x128xf32, #tpu.memory_space<vmem>>, vector<32x128xf32>
    %c0_46 = arith.constant 0 : index
    %c0_47 = arith.constant 0 : index
    %138 = vector.load %arg10[%c0_46, %c0_47] : memref<1x128xf32, #tpu.memory_space<vmem>>, vector<1x128xf32>
    %139 = tpu.concatenate %81, %99, %117, %135 in 0 : vector<2x32xf32>, vector<2x32xf32>, vector<2x32xf32>, vector<2x32xf32> -> vector<8x32xf32>
    %cst_48 = arith.constant dense<0.000000e+00> : vector<8x128xf32>
    %140 = tpu.matmul %139, %136, %cst_48 {dimension_numbers = #tpu.dot_dimension_numbers<[1], [0], [0], [1], [0, 0, 1, 1], [], []>} : vector<8x32xf32>, vector<32x128xf32>, vector<8x128xf32> -> vector<8x128xf32>
    %141 = vector.broadcast %138 : vector<1x128xf32> to vector<8x128xf32>
    %142 = arith.addf %140, %141 : vector<8x128xf32>
    %cst_49 = arith.constant 0.000000e+00 : f32
    %143 = vector.broadcast %cst_49 : f32 to vector<2x32xf32>
    %cst_50 = arith.constant 0.000000e+00 : f32
    %144 = vector.broadcast %cst_50 : f32 to vector<2x32xf32>
    %145 = vector.extract_strided_slice %142 {offsets = [0, 0], sizes = [2, 128], strides = [1, 1]} : vector<8x128xf32> to vector<2x128xf32>
    %cst_51 = arith.constant dense<0.000000e+00> : vector<2x128xf32>
    %146 = tpu.matmul %143, %137, %cst_51 {dimension_numbers = #tpu.dot_dimension_numbers<[1], [0], [0], [1], [0, 0, 1, 1], [], []>} : vector<2x32xf32>, vector<32x128xf32>, vector<2x128xf32> -> vector<2x128xf32>
    %147 = arith.addf %145, %146 : vector<2x128xf32>
    %148 = arith.negf %147 : vector<2x128xf32>
    %149 = math.exp %148 : vector<2x128xf32>
    %cst_52 = arith.constant 1.000000e+00 : f32
    %150 = vector.broadcast %cst_52 : f32 to vector<2x128xf32>
    %151 = arith.addf %150, %149 : vector<2x128xf32>
    %152 = arith.divf %150, %151 : vector<2x128xf32>
    %153 = math.tanh %147 : vector<2x128xf32>
    %154 = vector.extract_strided_slice %152 {offsets = [0, 32], sizes = [2, 32], strides = [1, 1]} : vector<2x128xf32> to vector<2x32xf32>
    %155 = arith.mulf %154, %144 : vector<2x32xf32>
    %156 = vector.extract_strided_slice %152 {offsets = [0, 0], sizes = [2, 32], strides = [1, 1]} : vector<2x128xf32> to vector<2x32xf32>
    %157 = vector.extract_strided_slice %153 {offsets = [0, 64], sizes = [2, 32], strides = [1, 1]} : vector<2x128xf32> to vector<2x32xf32>
    %158 = arith.mulf %156, %157 : vector<2x32xf32>
    %159 = arith.addf %155, %158 : vector<2x32xf32>
    %160 = vector.extract_strided_slice %152 {offsets = [0, 96], sizes = [2, 32], strides = [1, 1]} : vector<2x128xf32> to vector<2x32xf32>
    %161 = math.tanh %159 : vector<2x32xf32>
    %162 = arith.mulf %160, %161 : vector<2x32xf32>
    %163 = vector.extract_strided_slice %142 {offsets = [2, 0], sizes = [2, 128], strides = [1, 1]} : vector<8x128xf32> to vector<2x128xf32>
    %cst_53 = arith.constant dense<0.000000e+00> : vector<2x128xf32>
    %164 = tpu.matmul %162, %137, %cst_53 {dimension_numbers = #tpu.dot_dimension_numbers<[1], [0], [0], [1], [0, 0, 1, 1], [], []>} : vector<2x32xf32>, vector<32x128xf32>, vector<2x128xf32> -> vector<2x128xf32>
    %165 = arith.addf %163, %164 : vector<2x128xf32>
    %166 = arith.negf %165 : vector<2x128xf32>
    %167 = math.exp %166 : vector<2x128xf32>
    %cst_54 = arith.constant 1.000000e+00 : f32
    %168 = vector.broadcast %cst_54 : f32 to vector<2x128xf32>
    %169 = arith.addf %168, %167 : vector<2x128xf32>
    %170 = arith.divf %168, %169 : vector<2x128xf32>
    %171 = math.tanh %165 : vector<2x128xf32>
    %172 = vector.extract_strided_slice %170 {offsets = [0, 32], sizes = [2, 32], strides = [1, 1]} : vector<2x128xf32> to vector<2x32xf32>
    %173 = arith.mulf %172, %159 : vector<2x32xf32>
    %174 = vector.extract_strided_slice %170 {offsets = [0, 0], sizes = [2, 32], strides = [1, 1]} : vector<2x128xf32> to vector<2x32xf32>
    %175 = vector.extract_strided_slice %171 {offsets = [0, 64], sizes = [2, 32], strides = [1, 1]} : vector<2x128xf32> to vector<2x32xf32>
    %176 = arith.mulf %174, %175 : vector<2x32xf32>
    %177 = arith.addf %173, %176 : vector<2x32xf32>
    %178 = vector.extract_strided_slice %170 {offsets = [0, 96], sizes = [2, 32], strides = [1, 1]} : vector<2x128xf32> to vector<2x32xf32>
    %179 = math.tanh %177 : vector<2x32xf32>
    %180 = arith.mulf %178, %179 : vector<2x32xf32>
    %181 = vector.extract_strided_slice %142 {offsets = [4, 0], sizes = [2, 128], strides = [1, 1]} : vector<8x128xf32> to vector<2x128xf32>
    %cst_55 = arith.constant dense<0.000000e+00> : vector<2x128xf32>
    %182 = tpu.matmul %180, %137, %cst_55 {dimension_numbers = #tpu.dot_dimension_numbers<[1], [0], [0], [1], [0, 0, 1, 1], [], []>} : vector<2x32xf32>, vector<32x128xf32>, vector<2x128xf32> -> vector<2x128xf32>
    %183 = arith.addf %181, %182 : vector<2x128xf32>
    %184 = arith.negf %183 : vector<2x128xf32>
    %185 = math.exp %184 : vector<2x128xf32>
    %cst_56 = arith.constant 1.000000e+00 : f32
    %186 = vector.broadcast %cst_56 : f32 to vector<2x128xf32>
    %187 = arith.addf %186, %185 : vector<2x128xf32>
    %188 = arith.divf %186, %187 : vector<2x128xf32>
    %189 = math.tanh %183 : vector<2x128xf32>
    %190 = vector.extract_strided_slice %188 {offsets = [0, 32], sizes = [2, 32], strides = [1, 1]} : vector<2x128xf32> to vector<2x32xf32>
    %191 = arith.mulf %190, %177 : vector<2x32xf32>
    %192 = vector.extract_strided_slice %188 {offsets = [0, 0], sizes = [2, 32], strides = [1, 1]} : vector<2x128xf32> to vector<2x32xf32>
    %193 = vector.extract_strided_slice %189 {offsets = [0, 64], sizes = [2, 32], strides = [1, 1]} : vector<2x128xf32> to vector<2x32xf32>
    %194 = arith.mulf %192, %193 : vector<2x32xf32>
    %195 = arith.addf %191, %194 : vector<2x32xf32>
    %196 = vector.extract_strided_slice %188 {offsets = [0, 96], sizes = [2, 32], strides = [1, 1]} : vector<2x128xf32> to vector<2x32xf32>
    %197 = math.tanh %195 : vector<2x32xf32>
    %198 = arith.mulf %196, %197 : vector<2x32xf32>
    %199 = vector.extract_strided_slice %142 {offsets = [6, 0], sizes = [2, 128], strides = [1, 1]} : vector<8x128xf32> to vector<2x128xf32>
    %cst_57 = arith.constant dense<0.000000e+00> : vector<2x128xf32>
    %200 = tpu.matmul %198, %137, %cst_57 {dimension_numbers = #tpu.dot_dimension_numbers<[1], [0], [0], [1], [0, 0, 1, 1], [], []>} : vector<2x32xf32>, vector<32x128xf32>, vector<2x128xf32> -> vector<2x128xf32>
    %201 = arith.addf %199, %200 : vector<2x128xf32>
    %202 = arith.negf %201 : vector<2x128xf32>
    %203 = math.exp %202 : vector<2x128xf32>
    %cst_58 = arith.constant 1.000000e+00 : f32
    %204 = vector.broadcast %cst_58 : f32 to vector<2x128xf32>
    %205 = arith.addf %204, %203 : vector<2x128xf32>
    %206 = arith.divf %204, %205 : vector<2x128xf32>
    %207 = math.tanh %201 : vector<2x128xf32>
    %208 = vector.extract_strided_slice %206 {offsets = [0, 32], sizes = [2, 32], strides = [1, 1]} : vector<2x128xf32> to vector<2x32xf32>
    %209 = arith.mulf %208, %195 : vector<2x32xf32>
    %210 = vector.extract_strided_slice %206 {offsets = [0, 0], sizes = [2, 32], strides = [1, 1]} : vector<2x128xf32> to vector<2x32xf32>
    %211 = vector.extract_strided_slice %207 {offsets = [0, 64], sizes = [2, 32], strides = [1, 1]} : vector<2x128xf32> to vector<2x32xf32>
    %212 = arith.mulf %210, %211 : vector<2x32xf32>
    %213 = arith.addf %209, %212 : vector<2x32xf32>
    %214 = vector.extract_strided_slice %206 {offsets = [0, 96], sizes = [2, 32], strides = [1, 1]} : vector<2x128xf32> to vector<2x32xf32>
    %215 = math.tanh %213 : vector<2x32xf32>
    %216 = arith.mulf %214, %215 : vector<2x32xf32>
    %c0_59 = arith.constant 0 : index
    %c0_60 = arith.constant 0 : index
    %217 = vector.load %arg11[%c0_59, %c0_60] : memref<32x64xf32, #tpu.memory_space<vmem>>, vector<32x64xf32>
    %cst_61 = arith.constant dense<0.000000e+00> : vector<2x64xf32>
    %218 = tpu.matmul %216, %217, %cst_61 {dimension_numbers = #tpu.dot_dimension_numbers<[1], [0], [0], [1], [0, 0, 1, 1], [], []>} : vector<2x32xf32>, vector<32x64xf32>, vector<2x64xf32> -> vector<2x64xf32>
    %c0_62 = arith.constant 0 : index
    %c0_63 = arith.constant 0 : index
    %219 = vector.load %arg12[%c0_62, %c0_63] : memref<1x64xf32, #tpu.memory_space<vmem>>, vector<1x64xf32>
    %220 = vector.broadcast %219 : vector<1x64xf32> to vector<2x64xf32>
    %221 = arith.addf %218, %220 : vector<2x64xf32>
    %cst_64 = arith.constant 0.000000e+00 : f32
    %222 = vector.broadcast %cst_64 : f32 to vector<2x64xf32>
    %223 = arith.maximumf %221, %222 : vector<2x64xf32>
    %c0_65 = arith.constant 0 : index
    %c0_66 = arith.constant 0 : index
    %224 = vector.load %arg13[%c0_65, %c0_66] : memref<64x8xf32, #tpu.memory_space<vmem>>, vector<64x8xf32>
    %cst_67 = arith.constant dense<0.000000e+00> : vector<2x8xf32>
    %225 = tpu.matmul %223, %224, %cst_67 {dimension_numbers = #tpu.dot_dimension_numbers<[1], [0], [0], [1], [0, 0, 1, 1], [], []>} : vector<2x64xf32>, vector<64x8xf32>, vector<2x8xf32> -> vector<2x8xf32>
    %c0_68 = arith.constant 0 : index
    %c0_69 = arith.constant 0 : index
    %226 = vector.load %arg14[%c0_68, %c0_69] : memref<1x8xf32, #tpu.memory_space<vmem>>, vector<1x8xf32>
    %227 = vector.broadcast %226 : vector<1x8xf32> to vector<2x8xf32>
    %228 = arith.addf %225, %227 : vector<2x8xf32>
    %c0_70 = arith.constant 0 : index
    %c0_71 = arith.constant 0 : index
    %229 = vector.load %arg15[%c0_70, %c0_71] : memref<2x8xf32, #tpu.memory_space<vmem>>, vector<2x8xf32>
    tpu.vector_store %arg15[%c0_70, %c0_71], %228 {strides = array<i32>} : memref<2x8xf32, #tpu.memory_space<vmem>>, vector<2x8xf32>,
    return
  }
}

</mosaic_0001>

<llo_original>
// kernel: _lambda_.1
$region0: #{_lambda_.1}
  #allocation0 [shape = 'u32[]', space=smem, size = 0x4, offset = 0x4, fixed_abs, tag = 'smem constant byte address 0x4 - core index']
  #allocation1 [shape = 'u32[144,128]{1,0:T(1,128)}', space=vmem, size = 0x12000, scoped, tag = 'internal scratch']
  %s0 = inlined_call_operand.vmem [shape: f32[2,16,4], index: 0, kind: input, shape index: {}]
  %s1 = inlined_call_operand.hbm [shape: f32[3,4,64], index: 1, kind: input, shape index: {}]
  %s2 = inlined_call_operand.vmem [shape: f32[1,64], index: 2, kind: input, shape index: {}]
  %s3 = inlined_call_operand.hbm [shape: f32[192,128], index: 3, kind: input, shape index: {}]
  %s4 = inlined_call_operand.hbm [shape: f32[1,128], index: 4, kind: input, shape index: {}]
  %s5 = inlined_call_operand.vmem [shape: f32[128,128], index: 5, kind: input, shape index: {}]
  %s6 = inlined_call_operand.hbm [shape: f32[32,128], index: 6, kind: input, shape index: {}]
  %s7 = inlined_call_operand.hbm [shape: f32[1,128], index: 7, kind: input, shape index: {}]
  %s8 = inlined_call_operand.hbm [shape: f32[32,128], index: 8, kind: input, shape index: {}]
  %s9 = inlined_call_operand.hbm [shape: f32[32,128], index: 9, kind: input, shape index: {}]
  %s10 = inlined_call_operand.hbm [shape: f32[1,128], index: 10, kind: input, shape index: {}]
  %s11 = inlined_call_operand.hbm [shape: f32[32,64], index: 11, kind: input, shape index: {}]
  %s12 = inlined_call_operand.hbm [shape: f32[1,64], index: 12, kind: input, shape index: {}]
  %s13 = inlined_call_operand.vmem [shape: f32[64,8], index: 13, kind: input, shape index: {}]
  %s14 = inlined_call_operand.hbm [shape: f32[1,8], index: 14, kind: input, shape index: {}]
  %s15 = inlined_call_operand.hbm [shape: f32[2,8], index: 15, kind: output, shape index: {}]
  %s16 = sld [smem:[#allocation0]]
  $region114: #{_lambda_.1} parent=0
    _
  %s18 = ssub.s32 1, %s16
  %s19 = scalar_select 0, %s18, %s16
  $region1: #{_lambda_.1} parent=0
    #allocation2 [shape = 'u8[6144]{0}', space=vmem, size = 0x1800, scoped, tag = 'input window, operand 1, single buffered']
    #allocation3 [shape = 's32[1]{0}', space=sflag, size = 0x4, scoped, tag = 'scoped memory for _lambda_.1']
    #allocation4 [shape = 's32[1]{0}', space=sflag, size = 0x4, scoped, tag = 'scoped memory for _lambda_.1']
    #allocation5 [shape = 'u8[98304]{0}', space=vmem, size = 0x18000, scoped, tag = 'input window, operand 3, single buffered']
    #allocation6 [shape = 's32[1]{0}', space=sflag, size = 0x4, scoped, tag = 'scoped memory for _lambda_.1']
    #allocation7 [shape = 'u8[512]{0}', space=vmem, size = 0x400, scoped, tag = 'input window, operand 4, single buffered']
    #allocation8 [shape = 'u8[16384]{0}', space=vmem, size = 0x4000, scoped, tag = 'input window, operand 6, single buffered']
    #allocation9 [shape = 's32[1]{0}', space=sflag, size = 0x4, scoped, tag = 'scoped memory for _lambda_.1']
    #allocation10 [shape = 'u8[512]{0}', space=vmem, size = 0x400, scoped, tag = 'input window, operand 7, single buffered']
    #allocation11 [shape = 'u8[16384]{0}', space=vmem, size = 0x4000, scoped, tag = 'input window, operand 8, single buffered']
    #allocation12 [shape = 's32[1]{0}', space=sflag, size = 0x4, scoped, tag = 'scoped memory for _lambda_.1']
    #allocation13 [shape = 'u8[16384]{0}', space=vmem, size = 0x4000, scoped, tag = 'input window, operand 9, single buffered']
    #allocation14 [shape = 'u8[512]{0}', space=vmem, size = 0x400, scoped, tag = 'input window, operand 10, single buffered']
    #allocation15 [shape = 's32[1]{0}', space=sflag, size = 0x4, scoped, tag = 'scoped memory for _lambda_.1']
    #allocation16 [shape = 'u8[16384]{0}', space=vmem, size = 0x4000, scoped, tag = 'input window, operand 11, single buffered']
    #allocation17 [shape = 'u8[512]{0}', space=vmem, size = 0x400, scoped, tag = 'input window, operand 12, single buffered']
    #allocation18 [shape = 's32[1]{0}', space=sflag, size = 0x4, scoped, tag = 'scoped memory for _lambda_.1']
    #allocation19 [shape = 'u8[512]{0}', space=vmem, size = 0x400, scoped, tag = 'input window, operand 14, single buffered']
    #allocation20 [shape = 'u8[1024]{0}', space=vmem, size = 0x400, scoped, tag = 'output window, operand 0, single buffered']
    %20 = vsyncpa [#allocation3], 0
    %21 = vsyncpa [#allocation6], 0
    %22 = vsyncpa [#allocation9], 0
    %23 = vsyncpa [#allocation12], 0
    %24 = vsyncpa [#allocation15], 0
    %25 = vsyncpa [#allocation18], 0
    %26 = vsyncpa [#allocation4], 0
    // Predicated region
    $region2: #{_lambda_.1} parent=1 // pred_check
      _
    $region3: #{_lambda_.1} parent=1 // pred_check_branch
      %28 = sbr.rel (0) target = $region5
    $region4: #{_lambda_.1} parent=1 // pred_region
      _
    $region5: #{_lambda_.1} parent=1 // pred_fallthru
      _
    // Predicated region
    $region6: #{_lambda_.1} parent=1 // pred_check
      _
    $region7: #{_lambda_.1} parent=1 // pred_check_branch
      %30 = sbr.rel (0) target = $region9
    $region8: #{_lambda_.1} parent=1 // pred_region
      %s32 = ssub.s32 192, 192
      %33 = vsyncadd [#allocation3], %s32
      %s34 = sshll.u32 [#allocation2], 4
      %s35 = int_to_ptr.vmem [resolvable:$true] %s34
      %40 = dma.hbm_to_vmem [thread:$0]  %s1, 192, %s35, [#allocation3], 64, 64, 4
    $region9: #{_lambda_.1} parent=1 // pred_fallthru
      _
    // Predicated region
    $region10: #{_lambda_.1} parent=1 // pred_check
      _
    $region11: #{_lambda_.1} parent=1 // pred_check_branch
      %42 = sbr.rel (0) target = $region13
    $region12: #{_lambda_.1} parent=1 // pred_region
      _
    $region13: #{_lambda_.1} parent=1 // pred_fallthru
      _
    // Predicated region
    $region14: #{_lambda_.1} parent=1 // pred_check
      _
    $region15: #{_lambda_.1} parent=1 // pred_check_branch
      %44 = sbr.rel (0) target = $region17
    $region16: #{_lambda_.1} parent=1 // pred_region
      %s46 = ssub.s32 3072, 3072
      %47 = vsyncadd [#allocation6], %s46
      %s48 = sshll.u32 [#allocation5], 4
      %s49 = int_to_ptr.vmem [resolvable:$true] %s48
      %54 = dma.hbm_to_vmem [thread:$0]  %s3, 3072, %s49, [#allocation6], 128, 128, 8
    $region17: #{_lambda_.1} parent=1 // pred_fallthru
      _
    // Predicated region
    $region18: #{_lambda_.1} parent=1 // pred_check
      _
    $region19: #{_lambda_.1} parent=1 // pred_check_branch
      %56 = sbr.rel (0) target = $region21
    $region20: #{_lambda_.1} parent=1 // pred_region
      %s58 = ssub.s32 16, 16
      %59 = vsyncadd [#allocation6], %s58
      %s61 = sshll.u32 [#allocation7], 4
      %s62 = int_to_ptr.vmem [resolvable:$true] %s61
      %64 = dma.hbm_to_vmem [thread:$0]  %s4, 16, %s62, [#allocation6]
    $region21: #{_lambda_.1} parent=1 // pred_fallthru
      _
    // Predicated region
    $region22: #{_lambda_.1} parent=1 // pred_check
      _
    $region23: #{_lambda_.1} parent=1 // pred_check_branch
      %66 = sbr.rel (0) target = $region25
    $region24: #{_lambda_.1} parent=1 // pred_region
      _
    $region25: #{_lambda_.1} parent=1 // pred_fallthru
      _
    // Predicated region
    $region26: #{_lambda_.1} parent=1 // pred_check
      _
    $region27: #{_lambda_.1} parent=1 // pred_check_branch
      %68 = sbr.rel (0) target = $region29
    $region28: #{_lambda_.1} parent=1 // pred_region
      %s70 = ssub.s32 512, 512
      %71 = vsyncadd [#allocation9], %s70
      %s72 = sshll.u32 [#allocation8], 4
      %s73 = int_to_ptr.vmem [resolvable:$true] %s72
      %78 = dma.hbm_to_vmem [thread:$0]  %s6, 512, %s73, [#allocation9], 128, 128, 8
    $region29: #{_lambda_.1} parent=1 // pred_fallthru
      _
    // Predicated region
    $region30: #{_lambda_.1} parent=1 // pred_check
      _
    $region31: #{_lambda_.1} parent=1 // pred_check_branch
      %80 = sbr.rel (0) target = $region33
    $region32: #{_lambda_.1} parent=1 // pred_region
      %s82 = ssub.s32 16, 16
      %83 = vsyncadd [#allocation9], %s82
      %s85 = sshll.u32 [#allocation10], 4
      %s86 = int_to_ptr.vmem [resolvable:$true] %s85
      %88 = dma.hbm_to_vmem [thread:$0]  %s7, 16, %s86, [#allocation9]
    $region33: #{_lambda_.1} parent=1 // pred_fallthru
      _
    // Predicated region
    $region34: #{_lambda_.1} parent=1 // pred_check
      _
    $region35: #{_lambda_.1} parent=1 // pred_check_branch
      %90 = sbr.rel (0) target = $region37
    $region36: #{_lambda_.1} parent=1 // pred_region
      %s92 = ssub.s32 512, 512
      %93 = vsyncadd [#allocation12], %s92
      %s94 = sshll.u32 [#allocation11], 4
      %s95 = int_to_ptr.vmem [resolvable:$true] %s94
      %100 = dma.hbm_to_vmem [thread:$0]  %s8, 512, %s95, [#allocation12], 128, 128, 8
    $region37: #{_lambda_.1} parent=1 // pred_fallthru
      _
    // Predicated region
    $region38: #{_lambda_.1} parent=1 // pred_check
      _
    $region39: #{_lambda_.1} parent=1 // pred_check_branch
      %102 = sbr.rel (0) target = $region41
    $region40: #{_lambda_.1} parent=1 // pred_region
      %s104 = ssub.s32 512, 512
      %105 = vsyncadd [#allocation12], %s104
      %s106 = sshll.u32 [#allocation13], 4
      %s107 = int_to_ptr.vmem [resolvable:$true] %s106
      %112 = dma.hbm_to_vmem [thread:$0]  %s9, 512, %s107, [#allocation12], 128, 128, 8
    $region41: #{_lambda_.1} parent=1 // pred_fallthru
      _
    // Predicated region
    $region42: #{_lambda_.1} parent=1 // pred_check
      _
    $region43: #{_lambda_.1} parent=1 // pred_check_branch
      %114 = sbr.rel (0) target = $region45
    $region44: #{_lambda_.1} parent=1 // pred_region
      %s116 = ssub.s32 16, 16
      %117 = vsyncadd [#allocation15], %s116
      %s119 = sshll.u32 [#allocation14], 4
      %s120 = int_to_ptr.vmem [resolvable:$true] %s119
      %122 = dma.hbm_to_vmem [thread:$0]  %s10, 16, %s120, [#allocation15]
    $region45: #{_lambda_.1} parent=1 // pred_fallthru
      _
    // Predicated region
    $region46: #{_lambda_.1} parent=1 // pred_check
      _
    $region47: #{_lambda_.1} parent=1 // pred_check_branch
      %124 = sbr.rel (0) target = $region49
    $region48: #{_lambda_.1} parent=1 // pred_region
      %s126 = ssub.s32 512, 512
      %127 = vsyncadd [#allocation15], %s126
      %s128 = sshll.u32 [#allocation16], 4
      %s129 = int_to_ptr.vmem [resolvable:$true] %s128
      %134 = dma.hbm_to_vmem [thread:$0]  %s11, 512, %s129, [#allocation15], 128, 128, 8
    $region49: #{_lambda_.1} parent=1 // pred_fallthru
      _
    // Predicated region
    $region50: #{_lambda_.1} parent=1 // pred_check
      _
    $region51: #{_lambda_.1} parent=1 // pred_check_branch
      %136 = sbr.rel (0) target = $region53
    $region52: #{_lambda_.1} parent=1 // pred_region
      %s138 = ssub.s32 16, 16
      %139 = vsyncadd [#allocation18], %s138
      %s141 = sshll.u32 [#allocation17], 4
      %s142 = int_to_ptr.vmem [resolvable:$true] %s141
      %144 = dma.hbm_to_vmem [thread:$0]  %s12, 16, %s142, [#allocation18]
    $region53: #{_lambda_.1} parent=1 // pred_fallthru
      _
    // Predicated region
    $region54: #{_lambda_.1} parent=1 // pred_check
      _
    $region55: #{_lambda_.1} parent=1 // pred_check_branch
      %146 = sbr.rel (0) target = $region57
    $region56: #{_lambda_.1} parent=1 // pred_region
      _
    $region57: #{_lambda_.1} parent=1 // pred_fallthru
      _
    // Predicated region
    $region58: #{_lambda_.1} parent=1 // pred_check
      _
    $region59: #{_lambda_.1} parent=1 // pred_check_branch
      %148 = sbr.rel (0) target = $region61
    $region60: #{_lambda_.1} parent=1 // pred_region
      %s150 = ssub.s32 16, 16
      %151 = vsyncadd [#allocation18], %s150
      %s153 = sshll.u32 [#allocation19], 4
      %s154 = int_to_ptr.vmem [resolvable:$true] %s153
      %156 = dma.hbm_to_vmem [thread:$0]  %s14, 16, %s154, [#allocation18]
    $region61: #{_lambda_.1} parent=1 // pred_fallthru
      _
    // Predicated region
    $region62: #{_lambda_.1} parent=1 // pred_check
      _
    $region63: #{_lambda_.1} parent=1 // pred_check_branch
      %158 = sbr.rel (0) target = $region65
    $region64: #{_lambda_.1} parent=1 // pred_region
      %159 = dma.done [#allocation3], 192
    $region65: #{_lambda_.1} parent=1 // pred_fallthru
      _
    // Predicated region
    $region66: #{_lambda_.1} parent=1 // pred_check
      _
    $region67: #{_lambda_.1} parent=1 // pred_check_branch
      %161 = sbr.rel (0) target = $region69
    $region68: #{_lambda_.1} parent=1 // pred_region
      %162 = dma.done [#allocation6], 3072
    $region69: #{_lambda_.1} parent=1 // pred_fallthru
      _
    // Predicated region
    $region70: #{_lambda_.1} parent=1 // pred_check
      _
    $region71: #{_lambda_.1} parent=1 // pred_check_branch
      %164 = sbr.rel (0) target = $region73
    $region72: #{_lambda_.1} parent=1 // pred_region
      %165 = dma.done [#allocation6], 16
    $region73: #{_lambda_.1} parent=1 // pred_fallthru
      _
    // Predicated region
    $region74: #{_lambda_.1} parent=1 // pred_check
      _
    $region75: #{_lambda_.1} parent=1 // pred_check_branch
      %167 = sbr.rel (0) target = $region77
    $region76: #{_lambda_.1} parent=1 // pred_region
      %168 = dma.done [#allocation9], 512
    $region77: #{_lambda_.1} parent=1 // pred_fallthru
      _
    // Predicated region
    $region78: #{_lambda_.1} parent=1 // pred_check
      _
    $region79: #{_lambda_.1} parent=1 // pred_check_branch
      %170 = sbr.rel (0) target = $region81
    $region80: #{_lambda_.1} parent=1 // pred_region
      %171 = dma.done [#allocation9], 16
    $region81: #{_lambda_.1} parent=1 // pred_fallthru
      _
    // Predicated region
    $region82: #{_lambda_.1} parent=1 // pred_check
      _
    $region83: #{_lambda_.1} parent=1 // pred_check_branch
      %173 = sbr.rel (0) target = $region85
    $region84: #{_lambda_.1} parent=1 // pred_region
      %174 = dma.done [#allocation12], 512
    $region85: #{_lambda_.1} parent=1 // pred_fallthru
      _
    // Predicated region
    $region86: #{_lambda_.1} parent=1 // pred_check
      _
    $region87: #{_lambda_.1} parent=1 // pred_check_branch
      %176 = sbr.rel (0) target = $region89
    $region88: #{_lambda_.1} parent=1 // pred_region
      %177 = dma.done [#allocation12], 512
    $region89: #{_lambda_.1} parent=1 // pred_fallthru
      _
    // Predicated region
    $region90: #{_lambda_.1} parent=1 // pred_check
      _
    $region91: #{_lambda_.1} parent=1 // pred_check_branch
      %179 = sbr.rel (0) target = $region93
    $region92: #{_lambda_.1} parent=1 // pred_region
      %180 = dma.done [#allocation15], 16
    $region93: #{_lambda_.1} parent=1 // pred_fallthru
      _
    // Predicated region
    $region94: #{_lambda_.1} parent=1 // pred_check
      _
    $region95: #{_lambda_.1} parent=1 // pred_check_branch
      %182 = sbr.rel (0) target = $region97
    $region96: #{_lambda_.1} parent=1 // pred_region
      %183 = dma.done [#allocation15], 512
    $region97: #{_lambda_.1} parent=1 // pred_fallthru
      _
    // Predicated region
    $region98: #{_lambda_.1} parent=1 // pred_check
      _
    $region99: #{_lambda_.1} parent=1 // pred_check_branch
      %185 = sbr.rel (0) target = $region101
    $region100: #{_lambda_.1} parent=1 // pred_region
      %186 = dma.done [#allocation18], 16
    $region101: #{_lambda_.1} parent=1 // pred_fallthru
      _
    // Predicated region
    $region102: #{_lambda_.1} parent=1 // pred_check
      _
    $region103: #{_lambda_.1} parent=1 // pred_check_branch
      %188 = sbr.rel (0) target = $region105
    $region104: #{_lambda_.1} parent=1 // pred_region
      %189 = dma.done [#allocation18], 16
    $region105: #{_lambda_.1} parent=1 // pred_fallthru
      _
    %v190 = vld [vmem:[%s0] sm:$0xff]
    %v191 = vld [vmem:[%s0 + $0x8] sm:$0xff]
    %v192 = vld [vmem:[%s0 + $0x10] sm:$0xff]
    %v193 = vld [vmem:[%s0 + $0x18] sm:$0xff]
    %vm198 = vcmask 1040384
    %v199 = vrot.slane %v190, 7
    %v200 = vrot.slane %v191, 7
    %v201 = vsel %vm198, %v199, %v200
    %v202 = vrot.slane %v192, 7
    %v203 = vrot.slane %v193, 7
    %v204 = vsel %vm198, %v202, %v203
    %v209 = vsel %vm198, 0.0, %v199
    %v210 = vsel %vm198, 0.0, %v202
    %v211 = vsel %vm198, %v200, 0.0
    %v212 = vsel %vm198, %v203, 0.0
    %v213 = vld [vmem:[#allocation2] sm:$0xf]
    %vm218 = vcmask 1046528
    %v219 = vrot.slane %v209, 1
    %v220 = vrot.slane %v201, 1
    %v221 = vsel %vm218, %v219, %v220
    %v222 = vrot.slane %v211, 1
    %v223 = vsel %vm218, %v220, %v222
    %v224 = vrot.slane %v210, 1
    %v225 = vrot.slane %v204, 1
    %v226 = vsel %vm218, %v224, %v225
    %v227 = vrot.slane %v212, 1
    %v228 = vsel %vm218, %v225, %v227
    %s229 = scalar_lea.vmem [#allocation2], 4
    %v230 = vld [vmem:[%s229] sm:$0xf]
    %vm231 = vcmask 31744
    %v232 = vsel %vm231, %v221, 0
    %v234 = vsel %vm231, %v223, 0
    %v236 = vsel %vm231, %v226, 0
    %v238 = vsel %vm231, %v228, 0
    %vm240 = vcmask 1043456
    %v242 = vsel %vm240, %v230, 0
    %244 = vmatprep.subr.mxu0 0.0
    %245 = vmatpush1.msra.mxu0 0.0
    %246 = vmatprep.subr.mxu0 0.0
    %247 = vmatpush1.msra.mxu0 0.0
    %248 = vmatprep.subr.mxu0 0.0
    %249 = vmatpush1.msra.mxu0 0.0
    %250 = vmatprep.subr.mxu0 0.0
    %251 = vmatpush1.msra.mxu0 0.0
    %252 = vmatprep.subr.mxu0 0.0
    %253 = vmatpush1.msra.mxu0 0.0
    %254 = vmatprep.subr.mxu0 0.0
    %255 = vmatpush1.msra.mxu0 0.0
    %256 = vmatprep.subr.mxu0 0.0
    %257 = vmatpush1.msra.mxu0 0.0
    %258 = vmatprep.subr.mxu0 0.0
    %259 = vmatpush1.msra.mxu0 0.0
    %260 = vmatprep.subr.mxu0 0.0
    %261 = vmatpush1.msra.mxu0 0.0
    %262 = vmatprep.subr.mxu0 0.0
    %263 = vmatpush1.msra.mxu0 0.0
    %264 = vmatprep.subr.mxu0 0.0
    %265 = vmatpush1.msra.mxu0 0.0
    %266 = vmatprep.subr.mxu0 0.0
    %267 = vmatpush1.msra.mxu0 0.0
    %268 = vmatprep.subr.mxu0 0.0
    %269 = vmatpush1.msra.mxu0 0.0
    %270 = vmatprep.subr.mxu0 0.0
    %271 = vmatpush1.msra.mxu0 0.0
    %272 = vmatprep.subr.mxu0 0.0
    %273 = vmatpush1.msra.mxu0 0.0
    %274 = vmatprep.subr.mxu0 0.0
    %275 = vmatpush1.msra.mxu0 %v242
    %276 = vmatprep.subr.mxu0 0.0
    %277 = vmatpush2.msra.mxu0 0.0
    %278 = vmatprep.subr.mxu0 0.0
    %279 = vmatpush2.msra.mxu0 0.0
    %280 = vmatprep.subr.mxu0 0.0
    %281 = vmatpush2.msra.mxu0 0.0
    %282 = vmatprep.subr.mxu0 0.0
    %283 = vmatpush2.msra.mxu0 0.0
    %284 = vmatprep.subr.mxu0 0.0
    %285 = vmatpush2.msra.mxu0 0.0
    %286 = vmatprep.subr.mxu0 0.0
    %287 = vmatpush2.msra.mxu0 0.0
    %288 = vmatprep.subr.mxu0 0.0
    %289 = vmatpush2.msra.mxu0 0.0
    %290 = vmatprep.subr.mxu0 0.0
    %291 = vmatpush2.msra.mxu0 0.0
    %292 = vmatprep.subr.mxu0 0.0
    %293 = vmatpush2.msra.mxu0 0.0
    %294 = vmatprep.subr.mxu0 0.0
    %295 = vmatpush2.msra.mxu0 0.0
    %296 = vmatprep.subr.mxu0 0.0
    %297 = vmatpush2.msra.mxu0 0.0
    %298 = vmatprep.subr.mxu0 0.0
    %299 = vmatpush2.msra.mxu0 0.0
    %300 = vmatprep.subr.mxu0 0.0
    %301 = vmatpush2.msra.mxu0 0.0
    %302 = vmatprep.subr.mxu0 0.0
    %303 = vmatpush2.msra.mxu0 0.0
    %304 = vmatprep.subr.mxu0 0.0
    %305 = vmatpush2.msra.mxu0 0.0
    %306 = vmatprep.subr.mxu0 0.0
    %307 = vmatpush2.msra.mxu0 0.0
    %308 = vmatprep.mubr.f32.mxu0 0.0
    %309 = vmatmul.mubr.f32.gmra.mxu0 %v232
    %v310 = vpop.f32.mrf.mxu0
    %v311 = vadd.f32 0.0, %v310
    %v312 = vpop.f32.mrf.mxu0
    %313 = vmatprep.mubr.f32.mxu0 0.0
    %314 = vmatmul.mubr.f32.gmra.mxu0 %v234
    %v315 = vpop.f32.mrf.mxu0
    %v316 = vadd.f32 0.0, %v315
    %v317 = vpop.f32.mrf.mxu0
    %318 = vmatprep.mubr.f32.mxu0 0.0
    %319 = vmatmul.mubr.f32.gmra.mxu0 %v236
    %v320 = vpop.f32.mrf.mxu0
    %v321 = vadd.f32 0.0, %v320
    %v322 = vpop.f32.mrf.mxu0
    %323 = vmatprep.mubr.f32.mxu0 0.0
    %324 = vmatmul.mubr.f32.gmra.mxu0 %v238
    %v325 = vpop.f32.mrf.mxu0
    %v326 = vadd.f32 0.0, %v325
    %v327 = vpop.f32.mrf.mxu0
    %328 = vdwg.mxu0
    %v329 = vsel %vm231, %v209, 0
    %v331 = vsel %vm231, %v201, 0
    %v333 = vsel %vm231, %v210, 0
    %v335 = vsel %vm231, %v204, 0
    %v338 = vsel %vm240, %v213, 0
    %340 = vmatprep.subr.mxu0 0.0
    %341 = vmatpush1.msra.mxu0 0.0
    %342 = vmatprep.subr.mxu0 0.0
    %343 = vmatpush1.msra.mxu0 0.0
    %344 = vmatprep.subr.mxu0 0.0
    %345 = vmatpush1.msra.mxu0 0.0
    %346 = vmatprep.subr.mxu0 0.0
    %347 = vmatpush1.msra.mxu0 0.0
    %348 = vmatprep.subr.mxu0 0.0
    %349 = vmatpush1.msra.mxu0 0.0
    %350 = vmatprep.subr.mxu0 0.0
    %351 = vmatpush1.msra.mxu0 0.0
    %352 = vmatprep.subr.mxu0 0.0
    %353 = vmatpush1.msra.mxu0 0.0
    %354 = vmatprep.subr.mxu0 0.0
    %355 = vmatpush1.msra.mxu0 0.0
    %356 = vmatprep.subr.mxu0 0.0
    %357 = vmatpush1.msra.mxu0 0.0
    %358 = vmatprep.subr.mxu0 0.0
    %359 = vmatpush1.msra.mxu0 0.0
    %360 = vmatprep.subr.mxu0 0.0
    %361 = vmatpush1.msra.mxu0 0.0
    %362 = vmatprep.subr.mxu0 0.0
    %363 = vmatpush1.msra.mxu0 0.0
    %364 = vmatprep.subr.mxu0 0.0
    %365 = vmatpush1.msra.mxu0 0.0
    %366 = vmatprep.subr.mxu0 0.0
    %367 = vmatpush1.msra.mxu0 0.0
    %368 = vmatprep.subr.mxu0 0.0
    %369 = vmatpush1.msra.mxu0 0.0
    %370 = vmatprep.subr.mxu0 0.0
    %371 = vmatpush1.msra.mxu0 %v338
    %372 = vmatprep.subr.mxu0 0.0
    %373 = vmatpush2.msra.mxu0 0.0
    %374 = vmatprep.subr.mxu0 0.0
    %375 = vmatpush2.msra.mxu0 0.0
    %376 = vmatprep.subr.mxu0 0.0
    %377 = vmatpush2.msra.mxu0 0.0
    %378 = vmatprep.subr.mxu0 0.0
    %379 = vmatpush2.msra.mxu0 0.0
    %380 = vmatprep.subr.mxu0 0.0
    %381 = vmatpush2.msra.mxu0 0.0
    %382 = vmatprep.subr.mxu0 0.0
    %383 = vmatpush2.msra.mxu0 0.0
    %384 = vmatprep.subr.mxu0 0.0
    %385 = vmatpush2.msra.mxu0 0.0
    %386 = vmatprep.subr.mxu0 0.0
    %387 = vmatpush2.msra.mxu0 0.0
    %388 = vmatprep.subr.mxu0 0.0
    %389 = vmatpush2.msra.mxu0 0.0
    %390 = vmatprep.subr.mxu0 0.0
    %391 = vmatpush2.msra.mxu0 0.0
    %392 = vmatprep.subr.mxu0 0.0
    %393 = vmatpush2.msra.mxu0 0.0
    %394 = vmatprep.subr.mxu0 0.0
    %395 = vmatpush2.msra.mxu0 0.0
    %396 = vmatprep.subr.mxu0 0.0
    %397 = vmatpush2.msra.mxu0 0.0
    %398 = vmatprep.subr.mxu0 0.0
    %399 = vmatpush2.msra.mxu0 0.0
    %400 = vmatprep.subr.mxu0 0.0
    %401 = vmatpush2.msra.mxu0 0.0
    %402 = vmatprep.subr.mxu0 0.0
    %403 = vmatpush2.msra.mxu0 0.0
    %404 = vmatprep.mubr.f32.mxu0 0.0
    %405 = vmatmul.mubr.f32.gmra.mxu0 %v329
    %v406 = vpop.f32.mrf.mxu0
    %v407 = vadd.f32 %v311, %v406
    %v408 = vpop.f32.mrf.mxu0
    %409 = vmatprep.mubr.f32.mxu0 0.0
    %410 = vmatmul.mubr.f32.gmra.mxu0 %v331
    %v411 = vpop.f32.mrf.mxu0
    %v412 = vadd.f32 %v316, %v411
    %v413 = vpop.f32.mrf.mxu0
    %414 = vmatprep.mubr.f32.mxu0 0.0
    %415 = vmatmul.mubr.f32.gmra.mxu0 %v333
    %v416 = vpop.f32.mrf.mxu0
    %v417 = vadd.f32 %v321, %v416
    %v418 = vpop.f32.mrf.mxu0
    %419 = vmatprep.mubr.f32.mxu0 0.0
    %420 = vmatmul.mubr.f32.gmra.mxu0 %v335
    %v421 = vpop.f32.mrf.mxu0
    %v422 = vadd.f32 %v326, %v421
    %v423 = vpop.f32.mrf.mxu0
    %424 = vdwg.mxu0
    %vm425 = vcmask 1045504
    %v426 = vrot.slane %v209, 2
    %v427 = vrot.slane %v201, 2
    %v428 = vsel %vm425, %v426, %v427
    %v429 = vrot.slane %v211, 2
    %v430 = vsel %vm425, %v427, %v429
    %v431 = vrot.slane %v210, 2
    %v432 = vrot.slane %v204, 2
    %v433 = vsel %vm425, %v431, %v432
    %v434 = vrot.slane %v212, 2
    %v435 = vsel %vm425, %v432, %v434
    %s436 = scalar_lea.vmem [#allocation2], 8
    %v437 = vld [vmem:[%s436] sm:$0xf]
    %v438 = vsel %vm231, %v428, 0
    %v440 = vsel %vm231, %v430, 0
    %v442 = vsel %vm231, %v433, 0
    %v444 = vsel %vm231, %v435, 0
    %v447 = vsel %vm240, %v437, 0
    %449 = vmatprep.subr.mxu0 0.0
    %450 = vmatpush1.msra.mxu0 0.0
    %451 = vmatprep.subr.mxu0 0.0
    %452 = vmatpush1.msra.mxu0 0.0
    %453 = vmatprep.subr.mxu0 0.0
    %454 = vmatpush1.msra.mxu0 0.0
    %455 = vmatprep.subr.mxu0 0.0
    %456 = vmatpush1.msra.mxu0 0.0
    %457 = vmatprep.subr.mxu0 0.0
    %458 = vmatpush1.msra.mxu0 0.0
    %459 = vmatprep.subr.mxu0 0.0
    %460 = vmatpush1.msra.mxu0 0.0
    %461 = vmatprep.subr.mxu0 0.0
    %462 = vmatpush1.msra.mxu0 0.0
    %463 = vmatprep.subr.mxu0 0.0
    %464 = vmatpush1.msra.mxu0 0.0
    %465 = vmatprep.subr.mxu0 0.0
    %466 = vmatpush1.msra.mxu0 0.0
    %467 = vmatprep.subr.mxu0 0.0
    %468 = vmatpush1.msra.mxu0 0.0
    %469 = vmatprep.subr.mxu0 0.0
    %470 = vmatpush1.msra.mxu0 0.0
    %471 = vmatprep.subr.mxu0 0.0
    %472 = vmatpush1.msra.mxu0 0.0
    %473 = vmatprep.subr.mxu0 0.0
    %474 = vmatpush1.msra.mxu0 0.0
    %475 = vmatprep.subr.mxu0 0.0
    %476 = vmatpush1.msra.mxu0 0.0
    %477 = vmatprep.subr.mxu0 0.0
    %478 = vmatpush1.msra.mxu0 0.0
    %479 = vmatprep.subr.mxu0 0.0
    %480 = vmatpush1.msra.mxu0 %v447
    %481 = vmatprep.subr.mxu0 0.0
    %482 = vmatpush2.msra.mxu0 0.0
    %483 = vmatprep.subr.mxu0 0.0
    %484 = vmatpush2.msra.mxu0 0.0
    %485 = vmatprep.subr.mxu0 0.0
    %486 = vmatpush2.msra.mxu0 0.0
    %487 = vmatprep.subr.mxu0 0.0
    %488 = vmatpush2.msra.mxu0 0.0
    %489 = vmatprep.subr.mxu0 0.0
    %490 = vmatpush2.msra.mxu0 0.0
    %491 = vmatprep.subr.mxu0 0.0
    %492 = vmatpush2.msra.mxu0 0.0
    %493 = vmatprep.subr.mxu0 0.0
    %494 = vmatpush2.msra.mxu0 0.0
    %495 = vmatprep.subr.mxu0 0.0
    %496 = vmatpush2.msra.mxu0 0.0
    %497 = vmatprep.subr.mxu0 0.0
    %498 = vmatpush2.msra.mxu0 0.0
    %499 = vmatprep.subr.mxu0 0.0
    %500 = vmatpush2.msra.mxu0 0.0
    %501 = vmatprep.subr.mxu0 0.0
    %502 = vmatpush2.msra.mxu0 0.0
    %503 = vmatprep.subr.mxu0 0.0
    %504 = vmatpush2.msra.mxu0 0.0
    %505 = vmatprep.subr.mxu0 0.0
    %506 = vmatpush2.msra.mxu0 0.0
    %507 = vmatprep.subr.mxu0 0.0
    %508 = vmatpush2.msra.mxu0 0.0
    %509 = vmatprep.subr.mxu0 0.0
    %510 = vmatpush2.msra.mxu0 0.0
    %511 = vmatprep.subr.mxu0 0.0
    %512 = vmatpush2.msra.mxu0 0.0
    %513 = vmatprep.mubr.f32.mxu0 0.0
    %514 = vmatmul.mubr.f32.gmra.mxu0 %v438
    %v515 = vpop.f32.mrf.mxu0
    %v516 = vadd.f32 0.0, %v515
    %v517 = vpop.f32.mrf.mxu0
    %518 = vmatprep.mubr.f32.mxu0 0.0
    %519 = vmatmul.mubr.f32.gmra.mxu0 %v440
    %v520 = vpop.f32.mrf.mxu0
    %v521 = vadd.f32 0.0, %v520
    %v522 = vpop.f32.mrf.mxu0
    %523 = vmatprep.mubr.f32.mxu0 0.0
    %524 = vmatmul.mubr.f32.gmra.mxu0 %v442
    %v525 = vpop.f32.mrf.mxu0
    %v526 = vadd.f32 0.0, %v525
    %v527 = vpop.f32.mrf.mxu0
    %528 = vmatprep.mubr.f32.mxu0 0.0
    %529 = vmatmul.mubr.f32.gmra.mxu0 %v444
    %v530 = vpop.f32.mrf.mxu0
    %v531 = vadd.f32 0.0, %v530
    %v532 = vpop.f32.mrf.mxu0
    %533 = vdwg.mxu0
    %v534 = vadd.f32 %v407, %v516
    %v535 = vadd.f32 %v412, %v521
    %v536 = vadd.f32 %v417, %v526
    %v537 = vadd.f32 %v422, %v531
    %v538 = vld [vmem:[%s2] sm:$0x1]
    %v540 = vlaneseq
    %v541 = vshrl.u32 %v540, 7
    %v542 = vsub.s32 0, %v541
    %v543 = vrot.slane %v538, %v542
    %v545 = vadd.f32 %v534, %v543
    %v546 = vadd.f32 %v535, %v543
    %v547 = vadd.f32 %v536, %v543
    %v548 = vadd.f32 %v537, %v543
    %v549 = vmax.f32 %v545, 0.0
    %v550 = vmax.f32 %v546, 0.0
    %v551 = vmax.f32 %v547, 0.0
    %v552 = vmax.f32 %v548, 0.0
    %v557 = vcombine.high %v549, %v549
    %v559 = vunpack.c.l.s4 1983009808
    %v560 = vunpack.c.0.s8 %v559
    %v561 = vlaneseq
    %v562 = vshrl.u32 %v561, 7
    %v563 = vsub.s32 %v560, %v562
    %v564 = vrot.slane %v549, %v563
    %v566 = vunpack.c.l.s4 1983009808
    %v567 = vunpack.c.0.s8 %v566
    %v568 = vlaneseq
    %v569 = vshrl.u32 %v568, 7
    %v570 = vsub.s32 %v567, %v569
    %v571 = vrot.slane %v557, %v570
    %v572 = vcombine.high %v564, %v564
    %v573 = vcombine.high %v571, %v571
    %v574 = vcombine.high %v550, %v550
    %v576 = vunpack.c.l.s4 1983009808
    %v577 = vunpack.c.0.s8 %v576
    %v578 = vlaneseq
    %v579 = vshrl.u32 %v578, 7
    %v580 = vsub.s32 %v577, %v579
    %v581 = vrot.slane %v550, %v580
    %v583 = vunpack.c.l.s4 1983009808
    %v584 = vunpack.c.0.s8 %v583
    %v585 = vlaneseq
    %v586 = vshrl.u32 %v585, 7
    %v587 = vsub.s32 %v584, %v586
    %v588 = vrot.slane %v574, %v587
    %v589 = vcombine.high %v581, %v581
    %v590 = vcombine.high %v588, %v588
    %v591 = vcombine.high %v551, %v551
    %v593 = vunpack.c.l.s4 1983009808
    %v594 = vunpack.c.0.s8 %v593
    %v595 = vlaneseq
    %v596 = vshrl.u32 %v595, 7
    %v597 = vsub.s32 %v594, %v596
    %v598 = vrot.slane %v551, %v597
    %v600 = vunpack.c.l.s4 1983009808
    %v601 = vunpack.c.0.s8 %v600
    %v602 = vlaneseq
    %v603 = vshrl.u32 %v602, 7
    %v604 = vsub.s32 %v601, %v603
    %v605 = vrot.slane %v591, %v604
    %v606 = vcombine.high %v598, %v598
    %v607 = vcombine.high %v605, %v605
    %v608 = vcombine.high %v552, %v552
    %v610 = vunpack.c.l.s4 1983009808
    %v611 = vunpack.c.0.s8 %v610
    %v612 = vlaneseq
    %v613 = vshrl.u32 %v612, 7
    %v614 = vsub.s32 %v611, %v613
    %v615 = vrot.slane %v552, %v614
    %v617 = vunpack.c.l.s4 1983009808
    %v618 = vunpack.c.0.s8 %v617
    %v619 = vlaneseq
    %v620 = vshrl.u32 %v619, 7
    %v621 = vsub.s32 %v618, %v620
    %v622 = vrot.slane %v608, %v621
    %v623 = vcombine.high %v615, %v615
    %v624 = vcombine.high %v622, %v622
    %vm641 = vcmask 517120
    %v642 = vsel %vm641, %v564, -inf
    %v643 = vrot.slane %v642, 4
    %v644 = vmax.f32 %v642, %v643
    %v645 = vrot.slane %v644, 2
    %v646 = vmax.f32 %v644, %v645
    %v647 = vrot.slane %v646, 1
    %v648 = vmax.f32 %v646, %v647
    %v649 = vsel %vm641, %v572, -inf
    %v650 = vrot.slane %v649, 4
    %v651 = vmax.f32 %v649, %v650
    %v652 = vrot.slane %v651, 2
    %v653 = vmax.f32 %v651, %v652
    %v654 = vrot.slane %v653, 1
    %v655 = vmax.f32 %v653, %v654
    %v656 = vsel %vm641, %v571, -inf
    %v657 = vrot.slane %v656, 4
    %v658 = vmax.f32 %v656, %v657
    %v659 = vrot.slane %v658, 2
    %v660 = vmax.f32 %v658, %v659
    %v661 = vrot.slane %v660, 1
    %v662 = vmax.f32 %v660, %v661
    %v663 = vsel %vm641, %v573, -inf
    %v664 = vrot.slane %v663, 4
    %v665 = vmax.f32 %v663, %v664
    %v666 = vrot.slane %v665, 2
    %v667 = vmax.f32 %v665, %v666
    %v668 = vrot.slane %v667, 1
    %v669 = vmax.f32 %v667, %v668
    %v670 = vsel %vm641, %v581, -inf
    %v671 = vrot.slane %v670, 4
    %v672 = vmax.f32 %v670, %v671
    %v673 = vrot.slane %v672, 2
    %v674 = vmax.f32 %v672, %v673
    %v675 = vrot.slane %v674, 1
    %v676 = vmax.f32 %v674, %v675
    %v677 = vsel %vm641, %v589, -inf
    %v678 = vrot.slane %v677, 4
    %v679 = vmax.f32 %v677, %v678
    %v680 = vrot.slane %v679, 2
    %v681 = vmax.f32 %v679, %v680
    %v682 = vrot.slane %v681, 1
    %v683 = vmax.f32 %v681, %v682
    %v684 = vsel %vm641, %v588, -inf
    %v685 = vrot.slane %v684, 4
    %v686 = vmax.f32 %v684, %v685
    %v687 = vrot.slane %v686, 2
    %v688 = vmax.f32 %v686, %v687
    %v689 = vrot.slane %v688, 1
    %v690 = vmax.f32 %v688, %v689
    %v691 = vsel %vm641, %v590, -inf
    %v692 = vrot.slane %v691, 4
    %v693 = vmax.f32 %v691, %v692
    %v694 = vrot.slane %v693, 2
    %v695 = vmax.f32 %v693, %v694
    %v696 = vrot.slane %v695, 1
    %v697 = vmax.f32 %v695, %v696
    %v698 = vsel %vm641, %v598, -inf
    %v699 = vrot.slane %v698, 4
    %v700 = vmax.f32 %v698, %v699
    %v701 = vrot.slane %v700, 2
    %v702 = vmax.f32 %v700, %v701
    %v703 = vrot.slane %v702, 1
    %v704 = vmax.f32 %v702, %v703
    %v705 = vsel %vm641, %v606, -inf
    %v706 = vrot.slane %v705, 4
    %v707 = vmax.f32 %v705, %v706
    %v708 = vrot.slane %v707, 2
    %v709 = vmax.f32 %v707, %v708
    %v710 = vrot.slane %v709, 1
    %v711 = vmax.f32 %v709, %v710
    %v712 = vsel %vm641, %v605, -inf
    %v713 = vrot.slane %v712, 4
    %v714 = vmax.f32 %v712, %v713
    %v715 = vrot.slane %v714, 2
    %v716 = vmax.f32 %v714, %v715
    %v717 = vrot.slane %v716, 1
    %v718 = vmax.f32 %v716, %v717
    %v719 = vsel %vm641, %v607, -inf
    %v720 = vrot.slane %v719, 4
    %v721 = vmax.f32 %v719, %v720
    %v722 = vrot.slane %v721, 2
    %v723 = vmax.f32 %v721, %v722
    %v724 = vrot.slane %v723, 1
    %v725 = vmax.f32 %v723, %v724
    %v726 = vsel %vm641, %v615, -inf
    %v727 = vrot.slane %v726, 4
    %v728 = vmax.f32 %v726, %v727
    %v729 = vrot.slane %v728, 2
    %v730 = vmax.f32 %v728, %v729
    %v731 = vrot.slane %v730, 1
    %v732 = vmax.f32 %v730, %v731
    %v733 = vsel %vm641, %v623, -inf
    %v734 = vrot.slane %v733, 4
    %v735 = vmax.f32 %v733, %v734
    %v736 = vrot.slane %v735, 2
    %v737 = vmax.f32 %v735, %v736
    %v738 = vrot.slane %v737, 1
    %v739 = vmax.f32 %v737, %v738
    %v740 = vsel %vm641, %v622, -inf
    %v741 = vrot.slane %v740, 4
    %v742 = vmax.f32 %v740, %v741
    %v743 = vrot.slane %v742, 2
    %v744 = vmax.f32 %v742, %v743
    %v745 = vrot.slane %v744, 1
    %v746 = vmax.f32 %v744, %v745
    %v747 = vsel %vm641, %v624, -inf
    %v748 = vrot.slane %v747, 4
    %v749 = vmax.f32 %v747, %v748
    %v750 = vrot.slane %v749, 2
    %v751 = vmax.f32 %v749, %v750
    %v752 = vrot.slane %v751, 1
    %v753 = vmax.f32 %v751, %v752
    %vm770 = vcmask 1042434
    %v771 = vsel %vm770, %v655, %v648
    %vm772 = vcmask 1043459
    %v773 = vsel %vm772, %v662, %v771
    %vm774 = vcmask 1044484
    %v775 = vsel %vm774, %v669, %v773
    %vm776 = vcmask 1045509
    %v777 = vsel %vm776, %v676, %v775
    %vm778 = vcmask 1046534
    %v779 = vsel %vm778, %v683, %v777
    %vm780 = vcmask 1047559
    %v781 = vsel %vm780, %v690, %v779
    %v782 = vsel %vm770, %v711, %v704
    %v783 = vsel %vm772, %v718, %v782
    %v784 = vsel %vm774, %v725, %v783
    %v785 = vsel %vm776, %v732, %v784
    %v786 = vsel %vm778, %v739, %v785
    %v787 = vsel %vm780, %v746, %v786
    %v792 = vsel %vm198, 0.0, %v781
    %v793 = vsel %vm198, 0.0, %v787
    %v794 = vsel %vm198, %v697, 0.0
    %v795 = vsel %vm198, %v753, 0.0
    %v800 = vrot.slane %v792, 1
    %v801 = vrot.slane %v794, 1
    %v802 = vsel %vm218, %v800, %v801
    %v803 = vrot.slane %v793, 1
    %v804 = vrot.slane %v795, 1
    %v805 = vsel %vm218, %v803, %v804
    %806 = vrot.lane.b32.xlu0 %v802, 64
    %v807 = vpop.permute.xlu0 %806
    %808 = vrot.lane.b32.xlu0 %v805, 64
    %v809 = vpop.permute.xlu0 %808
    %v812 = vrot.slane %v792, 2
    %v813 = vrot.slane %v794, 2
    %v814 = vsel %vm425, %v812, %v813
    %v815 = vrot.slane %v793, 2
    %v816 = vrot.slane %v795, 2
    %v817 = vsel %vm425, %v815, %v816
    %vm818 = vcmask 523264
    %v819 = vsel %vm818, %v792, %v807
    %v820 = vsel %vm818, %v793, %v809
    %v821 = vld [vmem:[#allocation5] sm:$0xff]
    %v822 = vld [vmem:[#allocation5 + $0x8] sm:$0xff]
    %v823 = vld [vmem:[#allocation5 + $0x10] sm:$0xff]
    %v824 = vld [vmem:[#allocation5 + $0x18] sm:$0xff]
    %v825 = vld [vmem:[#allocation5 + $0x20] sm:$0xff]
    %v826 = vld [vmem:[#allocation5 + $0x28] sm:$0xff]
    %v827 = vld [vmem:[#allocation5 + $0x30] sm:$0xff]
    %v828 = vld [vmem:[#allocation5 + $0x38] sm:$0xff]
    %v829 = vld [vmem:[#allocation5 + $0x40] sm:$0xff]
    %v830 = vld [vmem:[#allocation5 + $0x48] sm:$0xff]
    %v831 = vld [vmem:[#allocation5 + $0x50] sm:$0xff]
    %v832 = vld [vmem:[#allocation5 + $0x58] sm:$0xff]
    %v833 = vld [vmem:[#allocation5 + $0x60] sm:$0xff]
    %v834 = vld [vmem:[#allocation5 + $0x68] sm:$0xff]
    %v835 = vld [vmem:[#allocation5 + $0x70] sm:$0xff]
    %v836 = vld [vmem:[#allocation5 + $0x78] sm:$0xff]
    %v837 = vld [vmem:[#allocation5 + $0x80] sm:$0xff]
    %v838 = vld [vmem:[#allocation5 + $0x88] sm:$0xff]
    %v839 = vld [vmem:[#allocation5 + $0x90] sm:$0xff]
    %v840 = vld [vmem:[#allocation5 + $0x98] sm:$0xff]
    %v841 = vld [vmem:[#allocation5 + $0xa0] sm:$0xff]
    %v842 = vld [vmem:[#allocation5 + $0xa8] sm:$0xff]
    %v843 = vld [vmem:[#allocation5 + $0xb0] sm:$0xff]
    %v844 = vld [vmem:[#allocation5 + $0xb8] sm:$0xff]
    %v845 = vld [vmem:[#allocation7] sm:$0x1]
    %v847 = vlaneseq
    %v848 = vshrl.u32 %v847, 7
    %v849 = vsub.s32 0, %v848
    %v850 = vrot.slane %v845, %v849
    %v852 = vsel %vm818, %v814, 0
    %v854 = vsel %vm818, %v817, 0
    %856 = vmatprep.subr.mxu0 0.0
    %857 = vmatpush1.msra.mxu0 %v836
    %858 = vmatprep.subr.mxu0 0.0
    %859 = vmatpush1.msra.mxu0 %v835
    %860 = vmatprep.subr.mxu0 0.0
    %861 = vmatpush1.msra.mxu0 %v834
    %862 = vmatprep.subr.mxu0 0.0
    %863 = vmatpush1.msra.mxu0 %v833
    %864 = vmatprep.subr.mxu0 0.0
    %865 = vmatpush1.msra.mxu0 %v832
    %866 = vmatprep.subr.mxu0 0.0
    %867 = vmatpush1.msra.mxu0 %v831
    %868 = vmatprep.subr.mxu0 0.0
    %869 = vmatpush1.msra.mxu0 %v830
    %870 = vmatprep.subr.mxu0 0.0
    %871 = vmatpush1.msra.mxu0 %v829
    %872 = vmatprep.subr.mxu0 0.0
    %873 = vmatpush1.msra.mxu0 %v828
    %874 = vmatprep.subr.mxu0 0.0
    %875 = vmatpush1.msra.mxu0 %v827
    %876 = vmatprep.subr.mxu0 0.0
    %877 = vmatpush1.msra.mxu0 %v826
    %878 = vmatprep.subr.mxu0 0.0
    %879 = vmatpush1.msra.mxu0 %v825
    %880 = vmatprep.subr.mxu0 0.0
    %881 = vmatpush1.msra.mxu0 %v824
    %882 = vmatprep.subr.mxu0 0.0
    %883 = vmatpush1.msra.mxu0 %v823
    %884 = vmatprep.subr.mxu0 0.0
    %885 = vmatpush1.msra.mxu0 %v822
    %886 = vmatprep.subr.mxu0 0.0
    %887 = vmatpush1.msra.mxu0 %v821
    %888 = vmatprep.subr.mxu0 0.0
    %889 = vmatpush2.msra.mxu0 0.0
    %890 = vmatprep.subr.mxu0 0.0
    %891 = vmatpush2.msra.mxu0 0.0
    %892 = vmatprep.subr.mxu0 0.0
    %893 = vmatpush2.msra.mxu0 0.0
    %894 = vmatprep.subr.mxu0 0.0
    %895 = vmatpush2.msra.mxu0 0.0
    %896 = vmatprep.subr.mxu0 0.0
    %897 = vmatpush2.msra.mxu0 0.0
    %898 = vmatprep.subr.mxu0 0.0
    %899 = vmatpush2.msra.mxu0 0.0
    %900 = vmatprep.subr.mxu0 0.0
    %901 = vmatpush2.msra.mxu0 0.0
    %902 = vmatprep.subr.mxu0 0.0
    %903 = vmatpush2.msra.mxu0 0.0
    %904 = vmatprep.subr.mxu0 0.0
    %905 = vmatpush2.msra.mxu0 %v844
    %906 = vmatprep.subr.mxu0 0.0
    %907 = vmatpush2.msra.mxu0 %v843
    %908 = vmatprep.subr.mxu0 0.0
    %909 = vmatpush2.msra.mxu0 %v842
    %910 = vmatprep.subr.mxu0 0.0
    %911 = vmatpush2.msra.mxu0 %v841
    %912 = vmatprep.subr.mxu0 0.0
    %913 = vmatpush2.msra.mxu0 %v840
    %914 = vmatprep.subr.mxu0 0.0
    %915 = vmatpush2.msra.mxu0 %v839
    %916 = vmatprep.subr.mxu0 0.0
    %917 = vmatpush2.msra.mxu0 %v838
    %918 = vmatprep.subr.mxu0 0.0
    %919 = vmatpush2.msra.mxu0 %v837
    %920 = vmatprep.mubr.f32.mxu0 %v852
    %921 = vmatmul.mubr.f32.gmra.mxu0 %v819
    %v922 = vpop.f32.mrf.mxu0
    %v923 = vadd.f32 %v850, %v922
    %v924 = vpop.f32.mrf.mxu0
    %925 = vmatprep.mubr.f32.mxu0 %v854
    %926 = vmatmul.mubr.f32.gmra.mxu0 %v820
    %v927 = vpop.f32.mrf.mxu0
    %v928 = vadd.f32 %v850, %v927
    %v929 = vpop.f32.mrf.mxu0
    %930 = vdwg.mxu0
    %v931 = vmax.f32 %v923, 0.0
    %v932 = vmax.f32 %v928, 0.0
    %v935 = vcombine.high %v931, %v931
    %v937 = vunpack.c.l.s4 1983009808
    %v938 = vunpack.c.0.s8 %v937
    %v939 = vlaneseq
    %v940 = vshrl.u32 %v939, 7
    %v941 = vsub.s32 %v938, %v940
    %v942 = vrot.slane %v931, %v941
    %v944 = vunpack.c.l.s4 1983009808
    %v945 = vunpack.c.0.s8 %v944
    %v946 = vlaneseq
    %v947 = vshrl.u32 %v946, 7
    %v948 = vsub.s32 %v945, %v947
    %v949 = vrot.slane %v935, %v948
    %v950 = vcombine.high %v942, %v942
    %v951 = vcombine.high %v949, %v949
    %v952 = vcombine.high %v932, %v932
    %v954 = vunpack.c.l.s4 1983009808
    %v955 = vunpack.c.0.s8 %v954
    %v956 = vlaneseq
    %v957 = vshrl.u32 %v956, 7
    %v958 = vsub.s32 %v955, %v957
    %v959 = vrot.slane %v932, %v958
    %v961 = vunpack.c.l.s4 1983009808
    %v962 = vunpack.c.0.s8 %v961
    %v963 = vlaneseq
    %v964 = vshrl.u32 %v963, 7
    %v965 = vsub.s32 %v962, %v964
    %v966 = vrot.slane %v952, %v965
    %v967 = vcombine.high %v959, %v959
    %v968 = vcombine.high %v966, %v966
    %vm977 = vcmask 1041408
    %v978 = vsel %vm977, %v942, -inf
    %v979 = vrot.slane %v978, 4
    %v980 = vmax.f32 %v978, %v979
    %v981 = vrot.slane %v980, 2
    %v982 = vmax.f32 %v980, %v981
    %v983 = vrot.slane %v982, 1
    %v984 = vmax.f32 %v982, %v983
    %v985 = vsel %vm977, %v950, -inf
    %v986 = vrot.slane %v985, 4
    %v987 = vmax.f32 %v985, %v986
    %v988 = vrot.slane %v987, 2
    %v989 = vmax.f32 %v987, %v988
    %v990 = vrot.slane %v989, 1
    %v991 = vmax.f32 %v989, %v990
    %v992 = vsel %vm977, %v949, -inf
    %v993 = vrot.slane %v992, 4
    %v994 = vmax.f32 %v992, %v993
    %v995 = vrot.slane %v994, 2
    %v996 = vmax.f32 %v994, %v995
    %v997 = vrot.slane %v996, 1
    %v998 = vmax.f32 %v996, %v997
    %v999 = vsel %vm977, %v951, -inf
    %v1000 = vrot.slane %v999, 4
    %v1001 = vmax.f32 %v999, %v1000
    %v1002 = vrot.slane %v1001, 2
    %v1003 = vmax.f32 %v1001, %v1002
    %v1004 = vrot.slane %v1003, 1
    %v1005 = vmax.f32 %v1003, %v1004
    %v1006 = vsel %vm977, %v959, -inf
    %v1007 = vrot.slane %v1006, 4
    %v1008 = vmax.f32 %v1006, %v1007
    %v1009 = vrot.slane %v1008, 2
    %v1010 = vmax.f32 %v1008, %v1009
    %v1011 = vrot.slane %v1010, 1
    %v1012 = vmax.f32 %v1010, %v1011
    %v1013 = vsel %vm977, %v967, -inf
    %v1014 = vrot.slane %v1013, 4
    %v1015 = vmax.f32 %v1013, %v1014
    %v1016 = vrot.slane %v1015, 2
    %v1017 = vmax.f32 %v1015, %v1016
    %v1018 = vrot.slane %v1017, 1
    %v1019 = vmax.f32 %v1017, %v1018
    %v1020 = vsel %vm977, %v966, -inf
    %v1021 = vrot.slane %v1020, 4
    %v1022 = vmax.f32 %v1020, %v1021
    %v1023 = vrot.slane %v1022, 2
    %v1024 = vmax.f32 %v1022, %v1023
    %v1025 = vrot.slane %v1024, 1
    %v1026 = vmax.f32 %v1024, %v1025
    %v1027 = vsel %vm977, %v968, -inf
    %v1028 = vrot.slane %v1027, 4
    %v1029 = vmax.f32 %v1027, %v1028
    %v1030 = vrot.slane %v1029, 2
    %v1031 = vmax.f32 %v1029, %v1030
    %v1032 = vrot.slane %v1031, 1
    %v1033 = vmax.f32 %v1031, %v1032
    %v1034 = vld [vmem:[%s5] sm:$0xff]
    %v1035 = vld [vmem:[%s5 + $0x8] sm:$0xff]
    %v1036 = vld [vmem:[%s5 + $0x10] sm:$0xff]
    %v1037 = vld [vmem:[%s5 + $0x18] sm:$0xff]
    %v1038 = vld [vmem:[%s5 + $0x20] sm:$0xff]
    %v1039 = vld [vmem:[%s5 + $0x28] sm:$0xff]
    %v1040 = vld [vmem:[%s5 + $0x30] sm:$0xff]
    %v1041 = vld [vmem:[%s5 + $0x38] sm:$0xff]
    %v1042 = vld [vmem:[%s5 + $0x40] sm:$0xff]
    %v1043 = vld [vmem:[%s5 + $0x48] sm:$0xff]
    %v1044 = vld [vmem:[%s5 + $0x50] sm:$0xff]
    %v1045 = vld [vmem:[%s5 + $0x58] sm:$0xff]
    %v1046 = vld [vmem:[%s5 + $0x60] sm:$0xff]
    %v1047 = vld [vmem:[%s5 + $0x68] sm:$0xff]
    %v1048 = vld [vmem:[%s5 + $0x70] sm:$0xff]
    %v1049 = vld [vmem:[%s5 + $0x78] sm:$0xff]
    %v1050 = vld [vmem:[#allocation8] sm:$0xff]
    %v1051 = vld [vmem:[#allocation8 + $0x8] sm:$0xff]
    %v1052 = vld [vmem:[#allocation8 + $0x10] sm:$0xff]
    %v1053 = vld [vmem:[#allocation8 + $0x18] sm:$0xff]
    %v1054 = vld [vmem:[#allocation10] sm:$0x1]
    %vm1057 = vcmask 1041409
    %v1058 = vsel %vm1057, %v1012, %v984
    %v1062 = vsel %vm772, %v1019, %v991
    %v1066 = vsel %vm776, %v1026, %v998
    %v1070 = vsel %vm780, %v1033, %v1005
    %v1072 = vsel %vm977, %v1058, %v1062
    %v1073 = vsel %vm240, %v1072, %v1066
    %v1074 = vsel %vm425, %v1073, %v1070
    %v1076 = vlaneseq
    %v1077 = vshrl.u32 %v1076, 7
    %v1078 = vsub.s32 0, %v1077
    %v1079 = vrot.slane %v1054, %v1078
    %1081 = vmatprep.subr.mxu0 0.0
    %1082 = vmatpush1.msra.mxu0 %v1049
    %1083 = vmatprep.subr.mxu0 0.0
    %1084 = vmatpush1.msra.mxu0 %v1048
    %1085 = vmatprep.subr.mxu0 0.0
    %1086 = vmatpush1.msra.mxu0 %v1047
    %1087 = vmatprep.subr.mxu0 0.0
    %1088 = vmatpush1.msra.mxu0 %v1046
    %1089 = vmatprep.subr.mxu0 0.0
    %1090 = vmatpush1.msra.mxu0 %v1045
    %1091 = vmatprep.subr.mxu0 0.0
    %1092 = vmatpush1.msra.mxu0 %v1044
    %1093 = vmatprep.subr.mxu0 0.0
    %1094 = vmatpush1.msra.mxu0 %v1043
    %1095 = vmatprep.subr.mxu0 0.0
    %1096 = vmatpush1.msra.mxu0 %v1042
    %1097 = vmatprep.subr.mxu0 0.0
    %1098 = vmatpush1.msra.mxu0 %v1041
    %1099 = vmatprep.subr.mxu0 0.0
    %1100 = vmatpush1.msra.mxu0 %v1040
    %1101 = vmatprep.subr.mxu0 0.0
    %1102 = vmatpush1.msra.mxu0 %v1039
    %1103 = vmatprep.subr.mxu0 0.0
    %1104 = vmatpush1.msra.mxu0 %v1038
    %1105 = vmatprep.subr.mxu0 0.0
    %1106 = vmatpush1.msra.mxu0 %v1037
    %1107 = vmatprep.subr.mxu0 0.0
    %1108 = vmatpush1.msra.mxu0 %v1036
    %1109 = vmatprep.subr.mxu0 0.0
    %1110 = vmatpush1.msra.mxu0 %v1035
    %1111 = vmatprep.subr.mxu0 0.0
    %1112 = vmatpush1.msra.mxu0 %v1034
    %1113 = vmatprep.subr.mxu0 0.0
    %1114 = vmatpush2.msra.mxu0 0.0
    %1115 = vmatprep.subr.mxu0 0.0
    %1116 = vmatpush2.msra.mxu0 0.0
    %1117 = vmatprep.subr.mxu0 0.0
    %1118 = vmatpush2.msra.mxu0 0.0
    %1119 = vmatprep.subr.mxu0 0.0
    %1120 = vmatpush2.msra.mxu0 0.0
    %1121 = vmatprep.subr.mxu0 0.0
    %1122 = vmatpush2.msra.mxu0 0.0
    %1123 = vmatprep.subr.mxu0 0.0
    %1124 = vmatpush2.msra.mxu0 0.0
    %1125 = vmatprep.subr.mxu0 0.0
    %1126 = vmatpush2.msra.mxu0 0.0
    %1127 = vmatprep.subr.mxu0 0.0
    %1128 = vmatpush2.msra.mxu0 0.0
    %1129 = vmatprep.subr.mxu0 0.0
    %1130 = vmatpush2.msra.mxu0 0.0
    %1131 = vmatprep.subr.mxu0 0.0
    %1132 = vmatpush2.msra.mxu0 0.0
    %1133 = vmatprep.subr.mxu0 0.0
    %1134 = vmatpush2.msra.mxu0 0.0
    %1135 = vmatprep.subr.mxu0 0.0
    %1136 = vmatpush2.msra.mxu0 0.0
    %1137 = vmatprep.subr.mxu0 0.0
    %1138 = vmatpush2.msra.mxu0 0.0
    %1139 = vmatprep.subr.mxu0 0.0
    %1140 = vmatpush2.msra.mxu0 0.0
    %1141 = vmatprep.subr.mxu0 0.0
    %1142 = vmatpush2.msra.mxu0 0.0
    %1143 = vmatprep.subr.mxu0 0.0
    %1144 = vmatpush2.msra.mxu0 0.0
    %1145 = vmatprep.mubr.f32.mxu0 0.0
    %1146 = vmatmul.mubr.f32.gmra.mxu0 %v1074
    %v1147 = vpop.f32.mrf.mxu0
    %v1148 = vadd.f32 %v1079, %v1147
    %v1149 = vpop.f32.mrf.mxu0
    %1150 = vdwg.mxu0
    %vm1151 = vcmask 261120
    %v1153 = vsel %vm1151, 0.0, 0
    %1155 = vmatprep.subr.mxu0 0.0
    %1156 = vmatpush1.msra.mxu0 0.0
    %1157 = vmatprep.subr.mxu0 0.0
    %1158 = vmatpush1.msra.mxu0 0.0
    %1159 = vmatprep.subr.mxu0 0.0
    %1160 = vmatpush1.msra.mxu0 0.0
    %1161 = vmatprep.subr.mxu0 0.0
    %1162 = vmatpush1.msra.mxu0 0.0
    %1163 = vmatprep.subr.mxu0 0.0
    %1164 = vmatpush1.msra.mxu0 0.0
    %1165 = vmatprep.subr.mxu0 0.0
    %1166 = vmatpush1.msra.mxu0 0.0
    %1167 = vmatprep.subr.mxu0 0.0
    %1168 = vmatpush1.msra.mxu0 0.0
    %1169 = vmatprep.subr.mxu0 0.0
    %1170 = vmatpush1.msra.mxu0 0.0
    %1171 = vmatprep.subr.mxu0 0.0
    %1172 = vmatpush1.msra.mxu0 0.0
    %1173 = vmatprep.subr.mxu0 0.0
    %1174 = vmatpush1.msra.mxu0 0.0
    %1175 = vmatprep.subr.mxu0 0.0
    %1176 = vmatpush1.msra.mxu0 0.0
    %1177 = vmatprep.subr.mxu0 0.0
    %1178 = vmatpush1.msra.mxu0 0.0
    %1179 = vmatprep.subr.mxu0 0.0
    %1180 = vmatpush1.msra.mxu0 %v1053
    %1181 = vmatprep.subr.mxu0 0.0
    %1182 = vmatpush1.msra.mxu0 %v1052
    %1183 = vmatprep.subr.mxu0 0.0
    %1184 = vmatpush1.msra.mxu0 %v1051
    %1185 = vmatprep.subr.mxu0 0.0
    %1186 = vmatpush1.msra.mxu0 %v1050
    %1187 = vmatprep.subr.mxu0 0.0
    %1188 = vmatpush2.msra.mxu0 0.0
    %1189 = vmatprep.subr.mxu0 0.0
    %1190 = vmatpush2.msra.mxu0 0.0
    %1191 = vmatprep.subr.mxu0 0.0
    %1192 = vmatpush2.msra.mxu0 0.0
    %1193 = vmatprep.subr.mxu0 0.0
    %1194 = vmatpush2.msra.mxu0 0.0
    %1195 = vmatprep.subr.mxu0 0.0
    %1196 = vmatpush2.msra.mxu0 0.0
    %1197 = vmatprep.subr.mxu0 0.0
    %1198 = vmatpush2.msra.mxu0 0.0
    %1199 = vmatprep.subr.mxu0 0.0
    %1200 = vmatpush2.msra.mxu0 0.0
    %1201 = vmatprep.subr.mxu0 0.0
    %1202 = vmatpush2.msra.mxu0 0.0
    %1203 = vmatprep.subr.mxu0 0.0
    %1204 = vmatpush2.msra.mxu0 0.0
    %1205 = vmatprep.subr.mxu0 0.0
    %1206 = vmatpush2.msra.mxu0 0.0
    %1207 = vmatprep.subr.mxu0 0.0
    %1208 = vmatpush2.msra.mxu0 0.0
    %1209 = vmatprep.subr.mxu0 0.0
    %1210 = vmatpush2.msra.mxu0 0.0
    %1211 = vmatprep.subr.mxu0 0.0
    %1212 = vmatpush2.msra.mxu0 0.0
    %1213 = vmatprep.subr.mxu0 0.0
    %1214 = vmatpush2.msra.mxu0 0.0
    %1215 = vmatprep.subr.mxu0 0.0
    %1216 = vmatpush2.msra.mxu0 0.0
    %1217 = vmatprep.subr.mxu0 0.0
    %1218 = vmatpush2.msra.mxu0 0.0
    %1219 = vmatprep.mubr.f32.mxu0 0.0
    %1220 = vmatmul.mubr.f32.gmra.mxu0 %v1153
    %v1221 = vpop.f32.mrf.mxu0
    %v1222 = vadd.f32 0.0, %v1221
    %v1223 = vpop.f32.mrf.mxu0
    %1224 = vdwg.mxu0
    %v1225 = vadd.f32 %v1148, %v1222
    %v1226 = vxor.u32 %v1225, 2147483648
    %v1227 = vmul.f32 %v1226, 1.442695
    %v1228 = vpow.pop %v1227
    %v1229 = vadd.f32 %v1228, 1.0
    %v1230 = vrcp.pop %v1229
    %v1231 = vmul.f32 1.0, %v1230
    %v1232 = vtanh.pop %v1225
    %v1233 = vmul.f32 %v1231, 0.0
    %1235 = vrot.lane.b32.xlu0 %v1232, 64
    %v1236 = vpop.permute.xlu0 %1235
    %v1238 = vmul.f32 %v1231, %v1236
    %1240 = vrot.lane.b32.xlu0 %v1238, 32
    %v1241 = vpop.permute.xlu0 %1240
    %v1243 = vadd.f32 %v1233, %v1241
    %v1244 = vtanh.pop %v1243
    %1246 = vrot.lane.b32.xlu0 %v1244, 64
    %v1247 = vpop.permute.xlu0 %1246
    %v1249 = vmul.f32 %v1231, %v1247
    %1251 = vrot.lane.b32.xlu0 %v1249, 32
    %v1252 = vpop.permute.xlu0 %1251
    %v1253 = vsel %vm1151, %v1252, 0
    %1255 = vmatprep.subr.mxu0 0.0
    %1256 = vmatpush1.msra.mxu0 0.0
    %1257 = vmatprep.subr.mxu0 0.0
    %1258 = vmatpush1.msra.mxu0 0.0
    %1259 = vmatprep.subr.mxu0 0.0
    %1260 = vmatpush1.msra.mxu0 0.0
    %1261 = vmatprep.subr.mxu0 0.0
    %1262 = vmatpush1.msra.mxu0 0.0
    %1263 = vmatprep.subr.mxu0 0.0
    %1264 = vmatpush1.msra.mxu0 0.0
    %1265 = vmatprep.subr.mxu0 0.0
    %1266 = vmatpush1.msra.mxu0 0.0
    %1267 = vmatprep.subr.mxu0 0.0
    %1268 = vmatpush1.msra.mxu0 0.0
    %1269 = vmatprep.subr.mxu0 0.0
    %1270 = vmatpush1.msra.mxu0 0.0
    %1271 = vmatprep.subr.mxu0 0.0
    %1272 = vmatpush1.msra.mxu0 0.0
    %1273 = vmatprep.subr.mxu0 0.0
    %1274 = vmatpush1.msra.mxu0 0.0
    %1275 = vmatprep.subr.mxu0 0.0
    %1276 = vmatpush1.msra.mxu0 0.0
    %1277 = vmatprep.subr.mxu0 0.0
    %1278 = vmatpush1.msra.mxu0 0.0
    %1279 = vmatprep.subr.mxu0 0.0
    %1280 = vmatpush1.msra.mxu0 %v1053
    %1281 = vmatprep.subr.mxu0 0.0
    %1282 = vmatpush1.msra.mxu0 %v1052
    %1283 = vmatprep.subr.mxu0 0.0
    %1284 = vmatpush1.msra.mxu0 %v1051
    %1285 = vmatprep.subr.mxu0 0.0
    %1286 = vmatpush1.msra.mxu0 %v1050
    %1287 = vmatprep.subr.mxu0 0.0
    %1288 = vmatpush2.msra.mxu0 0.0
    %1289 = vmatprep.subr.mxu0 0.0
    %1290 = vmatpush2.msra.mxu0 0.0
    %1291 = vmatprep.subr.mxu0 0.0
    %1292 = vmatpush2.msra.mxu0 0.0
    %1293 = vmatprep.subr.mxu0 0.0
    %1294 = vmatpush2.msra.mxu0 0.0
    %1295 = vmatprep.subr.mxu0 0.0
    %1296 = vmatpush2.msra.mxu0 0.0
    %1297 = vmatprep.subr.mxu0 0.0
    %1298 = vmatpush2.msra.mxu0 0.0
    %1299 = vmatprep.subr.mxu0 0.0
    %1300 = vmatpush2.msra.mxu0 0.0
    %1301 = vmatprep.subr.mxu0 0.0
    %1302 = vmatpush2.msra.mxu0 0.0
    %1303 = vmatprep.subr.mxu0 0.0
    %1304 = vmatpush2.msra.mxu0 0.0
    %1305 = vmatprep.subr.mxu0 0.0
    %1306 = vmatpush2.msra.mxu0 0.0
    %1307 = vmatprep.subr.mxu0 0.0
    %1308 = vmatpush2.msra.mxu0 0.0
    %1309 = vmatprep.subr.mxu0 0.0
    %1310 = vmatpush2.msra.mxu0 0.0
    %1311 = vmatprep.subr.mxu0 0.0
    %1312 = vmatpush2.msra.mxu0 0.0
    %1313 = vmatprep.subr.mxu0 0.0
    %1314 = vmatpush2.msra.mxu0 0.0
    %1315 = vmatprep.subr.mxu0 0.0
    %1316 = vmatpush2.msra.mxu0 0.0
    %1317 = vmatprep.subr.mxu0 0.0
    %1318 = vmatpush2.msra.mxu0 0.0
    %1319 = vmatprep.mubr.f32.mxu0 0.0
    %1320 = vmatmul.mubr.f32.gmra.mxu0 %v1253
    %v1321 = vpop.f32.mrf.mxu0
    %v1322 = vadd.f32 0.0, %v1321
    %v1323 = vpop.f32.mrf.mxu0
    %1324 = vdwg.mxu0
    %v1326 = vrot.slane %v1322, 6
    %v1328 = vadd.f32 %v1148, %v1326
    %v1329 = vxor.u32 %v1328, 2147483648
    %v1330 = vmul.f32 %v1329, 1.442695
    %v1331 = vpow.pop %v1330
    %v1332 = vadd.f32 %v1331, 1.0
    %v1333 = vrcp.pop %v1332
    %v1334 = vmul.f32 1.0, %v1333
    %v1335 = vtanh.pop %v1328
    %v1337 = vrot.slane %v1243, 6
    %v1339 = vmul.f32 %v1334, %v1337
    %1341 = vrot.lane.b32.xlu0 %v1335, 64
    %v1342 = vpop.permute.xlu0 %1341
    %v1344 = vmul.f32 %v1334, %v1342
    %1346 = vrot.lane.b32.xlu0 %v1344, 32
    %v1347 = vpop.permute.xlu0 %1346
    %v1349 = vadd.f32 %v1339, %v1347
    %v1350 = vtanh.pop %v1349
    %1352 = vrot.lane.b32.xlu0 %v1350, 64
    %v1353 = vpop.permute.xlu0 %1352
    %v1355 = vmul.f32 %v1334, %v1353
    %v1357 = vrot.slane %v1355, 2
    %1358 = vrot.lane.b32.xlu0 %v1357, 32
    %v1359 = vpop.permute.xlu0 %1358
    %v1360 = vsel %vm1151, %v1359, 0
    %1362 = vmatprep.subr.mxu0 0.0
    %1363 = vmatpush1.msra.mxu0 0.0
    %1364 = vmatprep.subr.mxu0 0.0
    %1365 = vmatpush1.msra.mxu0 0.0
    %1366 = vmatprep.subr.mxu0 0.0
    %1367 = vmatpush1.msra.mxu0 0.0
    %1368 = vmatprep.subr.mxu0 0.0
    %1369 = vmatpush1.msra.mxu0 0.0
    %1370 = vmatprep.subr.mxu0 0.0
    %1371 = vmatpush1.msra.mxu0 0.0
    %1372 = vmatprep.subr.mxu0 0.0
    %1373 = vmatpush1.msra.mxu0 0.0
    %1374 = vmatprep.subr.mxu0 0.0
    %1375 = vmatpush1.msra.mxu0 0.0
    %1376 = vmatprep.subr.mxu0 0.0
    %1377 = vmatpush1.msra.mxu0 0.0
    %1378 = vmatprep.subr.mxu0 0.0
    %1379 = vmatpush1.msra.mxu0 0.0
    %1380 = vmatprep.subr.mxu0 0.0
    %1381 = vmatpush1.msra.mxu0 0.0
    %1382 = vmatprep.subr.mxu0 0.0
    %1383 = vmatpush1.msra.mxu0 0.0
    %1384 = vmatprep.subr.mxu0 0.0
    %1385 = vmatpush1.msra.mxu0 0.0
    %1386 = vmatprep.subr.mxu0 0.0
    %1387 = vmatpush1.msra.mxu0 %v1053
    %1388 = vmatprep.subr.mxu0 0.0
    %1389 = vmatpush1.msra.mxu0 %v1052
    %1390 = vmatprep.subr.mxu0 0.0
    %1391 = vmatpush1.msra.mxu0 %v1051
    %1392 = vmatprep.subr.mxu0 0.0
    %1393 = vmatpush1.msra.mxu0 %v1050
    %1394 = vmatprep.subr.mxu0 0.0
    %1395 = vmatpush2.msra.mxu0 0.0
    %1396 = vmatprep.subr.mxu0 0.0
    %1397 = vmatpush2.msra.mxu0 0.0
    %1398 = vmatprep.subr.mxu0 0.0
    %1399 = vmatpush2.msra.mxu0 0.0
    %1400 = vmatprep.subr.mxu0 0.0
    %1401 = vmatpush2.msra.mxu0 0.0
    %1402 = vmatprep.subr.mxu0 0.0
    %1403 = vmatpush2.msra.mxu0 0.0
    %1404 = vmatprep.subr.mxu0 0.0
    %1405 = vmatpush2.msra.mxu0 0.0
    %1406 = vmatprep.subr.mxu0 0.0
    %1407 = vmatpush2.msra.mxu0 0.0
    %1408 = vmatprep.subr.mxu0 0.0
    %1409 = vmatpush2.msra.mxu0 0.0
    %1410 = vmatprep.subr.mxu0 0.0
    %1411 = vmatpush2.msra.mxu0 0.0
    %1412 = vmatprep.subr.mxu0 0.0
    %1413 = vmatpush2.msra.mxu0 0.0
    %1414 = vmatprep.subr.mxu0 0.0
    %1415 = vmatpush2.msra.mxu0 0.0
    %1416 = vmatprep.subr.mxu0 0.0
    %1417 = vmatpush2.msra.mxu0 0.0
    %1418 = vmatprep.subr.mxu0 0.0
    %1419 = vmatpush2.msra.mxu0 0.0
    %1420 = vmatprep.subr.mxu0 0.0
    %1421 = vmatpush2.msra.mxu0 0.0
    %1422 = vmatprep.subr.mxu0 0.0
    %1423 = vmatpush2.msra.mxu0 0.0
    %1424 = vmatprep.subr.mxu0 0.0
    %1425 = vmatpush2.msra.mxu0 0.0
    %1426 = vmatprep.mubr.f32.mxu0 0.0
    %1427 = vmatmul.mubr.f32.gmra.mxu0 %v1360
    %v1428 = vpop.f32.mrf.mxu0
    %v1429 = vadd.f32 0.0, %v1428
    %v1430 = vpop.f32.mrf.mxu0
    %1431 = vdwg.mxu0
    %v1433 = vrot.slane %v1429, 4
    %v1435 = vadd.f32 %v1148, %v1433
    %v1436 = vxor.u32 %v1435, 2147483648
    %v1437 = vmul.f32 %v1436, 1.442695
    %v1438 = vpow.pop %v1437
    %v1439 = vadd.f32 %v1438, 1.0
    %v1440 = vrcp.pop %v1439
    %v1441 = vmul.f32 1.0, %v1440
    %v1442 = vtanh.pop %v1435
    %v1444 = vrot.slane %v1349, 6
    %v1446 = vmul.f32 %v1441, %v1444
    %1448 = vrot.lane.b32.xlu0 %v1442, 64
    %v1449 = vpop.permute.xlu0 %1448
    %v1451 = vmul.f32 %v1441, %v1449
    %1453 = vrot.lane.b32.xlu0 %v1451, 32
    %v1454 = vpop.permute.xlu0 %1453
    %v1456 = vadd.f32 %v1446, %v1454
    %v1457 = vtanh.pop %v1456
    %1459 = vrot.lane.b32.xlu0 %v1457, 64
    %v1460 = vpop.permute.xlu0 %1459
    %v1462 = vmul.f32 %v1441, %v1460
    %v1464 = vrot.slane %v1462, 4
    %1465 = vrot.lane.b32.xlu0 %v1464, 32
    %v1466 = vpop.permute.xlu0 %1465
    %v1467 = vsel %vm1151, %v1466, 0
    %1469 = vmatprep.subr.mxu0 0.0
    %1470 = vmatpush1.msra.mxu0 0.0
    %1471 = vmatprep.subr.mxu0 0.0
    %1472 = vmatpush1.msra.mxu0 0.0
    %1473 = vmatprep.subr.mxu0 0.0
    %1474 = vmatpush1.msra.mxu0 0.0
    %1475 = vmatprep.subr.mxu0 0.0
    %1476 = vmatpush1.msra.mxu0 0.0
    %1477 = vmatprep.subr.mxu0 0.0
    %1478 = vmatpush1.msra.mxu0 0.0
    %1479 = vmatprep.subr.mxu0 0.0
    %1480 = vmatpush1.msra.mxu0 0.0
    %1481 = vmatprep.subr.mxu0 0.0
    %1482 = vmatpush1.msra.mxu0 0.0
    %1483 = vmatprep.subr.mxu0 0.0
    %1484 = vmatpush1.msra.mxu0 0.0
    %1485 = vmatprep.subr.mxu0 0.0
    %1486 = vmatpush1.msra.mxu0 0.0
    %1487 = vmatprep.subr.mxu0 0.0
    %1488 = vmatpush1.msra.mxu0 0.0
    %1489 = vmatprep.subr.mxu0 0.0
    %1490 = vmatpush1.msra.mxu0 0.0
    %1491 = vmatprep.subr.mxu0 0.0
    %1492 = vmatpush1.msra.mxu0 0.0
    %1493 = vmatprep.subr.mxu0 0.0
    %1494 = vmatpush1.msra.mxu0 %v1053
    %1495 = vmatprep.subr.mxu0 0.0
    %1496 = vmatpush1.msra.mxu0 %v1052
    %1497 = vmatprep.subr.mxu0 0.0
    %1498 = vmatpush1.msra.mxu0 %v1051
    %1499 = vmatprep.subr.mxu0 0.0
    %1500 = vmatpush1.msra.mxu0 %v1050
    %1501 = vmatprep.subr.mxu0 0.0
    %1502 = vmatpush2.msra.mxu0 0.0
    %1503 = vmatprep.subr.mxu0 0.0
    %1504 = vmatpush2.msra.mxu0 0.0
    %1505 = vmatprep.subr.mxu0 0.0
    %1506 = vmatpush2.msra.mxu0 0.0
    %1507 = vmatprep.subr.mxu0 0.0
    %1508 = vmatpush2.msra.mxu0 0.0
    %1509 = vmatprep.subr.mxu0 0.0
    %1510 = vmatpush2.msra.mxu0 0.0
    %1511 = vmatprep.subr.mxu0 0.0
    %1512 = vmatpush2.msra.mxu0 0.0
    %1513 = vmatprep.subr.mxu0 0.0
    %1514 = vmatpush2.msra.mxu0 0.0
    %1515 = vmatprep.subr.mxu0 0.0
    %1516 = vmatpush2.msra.mxu0 0.0
    %1517 = vmatprep.subr.mxu0 0.0
    %1518 = vmatpush2.msra.mxu0 0.0
    %1519 = vmatprep.subr.mxu0 0.0
    %1520 = vmatpush2.msra.mxu0 0.0
    %1521 = vmatprep.subr.mxu0 0.0
    %1522 = vmatpush2.msra.mxu0 0.0
    %1523 = vmatprep.subr.mxu0 0.0
    %1524 = vmatpush2.msra.mxu0 0.0
    %1525 = vmatprep.subr.mxu0 0.0
    %1526 = vmatpush2.msra.mxu0 0.0
    %1527 = vmatprep.subr.mxu0 0.0
    %1528 = vmatpush2.msra.mxu0 0.0
    %1529 = vmatprep.subr.mxu0 0.0
    %1530 = vmatpush2.msra.mxu0 0.0
    %1531 = vmatprep.subr.mxu0 0.0
    %1532 = vmatpush2.msra.mxu0 0.0
    %1533 = vmatprep.mubr.f32.mxu0 0.0
    %1534 = vmatmul.mubr.f32.gmra.mxu0 %v1467
    %v1535 = vpop.f32.mrf.mxu0
    %v1536 = vadd.f32 0.0, %v1535
    %v1537 = vpop.f32.mrf.mxu0
    %1538 = vdwg.mxu0
    %v1540 = vrot.slane %v1536, 2
    %v1542 = vadd.f32 %v1148, %v1540
    %v1543 = vxor.u32 %v1542, 2147483648
    %v1544 = vmul.f32 %v1543, 1.442695
    %v1545 = vpow.pop %v1544
    %v1546 = vadd.f32 %v1545, 1.0
    %v1547 = vrcp.pop %v1546
    %v1548 = vmul.f32 1.0, %v1547
    %v1549 = vtanh.pop %v1542
    %v1551 = vrot.slane %v1456, 6
    %v1553 = vmul.f32 %v1548, %v1551
    %1555 = vrot.lane.b32.xlu0 %v1549, 64
    %v1556 = vpop.permute.xlu0 %1555
    %v1558 = vmul.f32 %v1548, %v1556
    %1560 = vrot.lane.b32.xlu0 %v1558, 32
    %v1561 = vpop.permute.xlu0 %1560
    %v1563 = vadd.f32 %v1553, %v1561
    %v1564 = vtanh.pop %v1563
    %1566 = vrot.lane.b32.xlu0 %v1564, 64
    %v1567 = vpop.permute.xlu0 %1566
    %v1569 = vmul.f32 %v1548, %v1567
    %v1570 = vld [vmem:[#allocation11] sm:$0xff]
    %v1571 = vld [vmem:[#allocation11 + $0x8] sm:$0xff]
    %v1572 = vld [vmem:[#allocation11 + $0x10] sm:$0xff]
    %v1573 = vld [vmem:[#allocation11 + $0x18] sm:$0xff]
    %v1574 = vld [vmem:[#allocation13] sm:$0xff]
    %v1575 = vld [vmem:[#allocation13 + $0x8] sm:$0xff]
    %v1576 = vld [vmem:[#allocation13 + $0x10] sm:$0xff]
    %v1577 = vld [vmem:[#allocation13 + $0x18] sm:$0xff]
    %v1578 = vld [vmem:[#allocation14] sm:$0x1]
    %v1579 = vsel %vm977, %v1249, %v1355
    %v1580 = vsel %vm240, %v1579, %v1462
    %v1581 = vsel %vm425, %v1580, %v1569
    %v1583 = vlaneseq
    %v1584 = vshrl.u32 %v1583, 7
    %v1585 = vsub.s32 0, %v1584
    %v1586 = vrot.slane %v1578, %v1585
    %1589 = vrot.lane.b32.xlu0 %v1581, 32
    %v1590 = vpop.permute.xlu0 %1589
    %v1591 = vsel %vm1151, %v1590, 0
    %1593 = vmatprep.subr.mxu0 0.0
    %1594 = vmatpush1.msra.mxu0 0.0
    %1595 = vmatprep.subr.mxu0 0.0
    %1596 = vmatpush1.msra.mxu0 0.0
    %1597 = vmatprep.subr.mxu0 0.0
    %1598 = vmatpush1.msra.mxu0 0.0
    %1599 = vmatprep.subr.mxu0 0.0
    %1600 = vmatpush1.msra.mxu0 0.0
    %1601 = vmatprep.subr.mxu0 0.0
    %1602 = vmatpush1.msra.mxu0 0.0
    %1603 = vmatprep.subr.mxu0 0.0
    %1604 = vmatpush1.msra.mxu0 0.0
    %1605 = vmatprep.subr.mxu0 0.0
    %1606 = vmatpush1.msra.mxu0 0.0
    %1607 = vmatprep.subr.mxu0 0.0
    %1608 = vmatpush1.msra.mxu0 0.0
    %1609 = vmatprep.subr.mxu0 0.0
    %1610 = vmatpush1.msra.mxu0 0.0
    %1611 = vmatprep.subr.mxu0 0.0
    %1612 = vmatpush1.msra.mxu0 0.0
    %1613 = vmatprep.subr.mxu0 0.0
    %1614 = vmatpush1.msra.mxu0 0.0
    %1615 = vmatprep.subr.mxu0 0.0
    %1616 = vmatpush1.msra.mxu0 0.0
    %1617 = vmatprep.subr.mxu0 0.0
    %1618 = vmatpush1.msra.mxu0 %v1573
    %1619 = vmatprep.subr.mxu0 0.0
    %1620 = vmatpush1.msra.mxu0 %v1572
    %1621 = vmatprep.subr.mxu0 0.0
    %1622 = vmatpush1.msra.mxu0 %v1571
    %1623 = vmatprep.subr.mxu0 0.0
    %1624 = vmatpush1.msra.mxu0 %v1570
    %1625 = vmatprep.subr.mxu0 0.0
    %1626 = vmatpush2.msra.mxu0 0.0
    %1627 = vmatprep.subr.mxu0 0.0
    %1628 = vmatpush2.msra.mxu0 0.0
    %1629 = vmatprep.subr.mxu0 0.0
    %1630 = vmatpush2.msra.mxu0 0.0
    %1631 = vmatprep.subr.mxu0 0.0
    %1632 = vmatpush2.msra.mxu0 0.0
    %1633 = vmatprep.subr.mxu0 0.0
    %1634 = vmatpush2.msra.mxu0 0.0
    %1635 = vmatprep.subr.mxu0 0.0
    %1636 = vmatpush2.msra.mxu0 0.0
    %1637 = vmatprep.subr.mxu0 0.0
    %1638 = vmatpush2.msra.mxu0 0.0
    %1639 = vmatprep.subr.mxu0 0.0
    %1640 = vmatpush2.msra.mxu0 0.0
    %1641 = vmatprep.subr.mxu0 0.0
    %1642 = vmatpush2.msra.mxu0 0.0
    %1643 = vmatprep.subr.mxu0 0.0
    %1644 = vmatpush2.msra.mxu0 0.0
    %1645 = vmatprep.subr.mxu0 0.0
    %1646 = vmatpush2.msra.mxu0 0.0
    %1647 = vmatprep.subr.mxu0 0.0
    %1648 = vmatpush2.msra.mxu0 0.0
    %1649 = vmatprep.subr.mxu0 0.0
    %1650 = vmatpush2.msra.mxu0 0.0
    %1651 = vmatprep.subr.mxu0 0.0
    %1652 = vmatpush2.msra.mxu0 0.0
    %1653 = vmatprep.subr.mxu0 0.0
    %1654 = vmatpush2.msra.mxu0 0.0
    %1655 = vmatprep.subr.mxu0 0.0
    %1656 = vmatpush2.msra.mxu0 0.0
    %1657 = vmatprep.mubr.f32.mxu0 0.0
    %1658 = vmatmul.mubr.f32.gmra.mxu0 %v1591
    %v1659 = vpop.f32.mrf.mxu0
    %v1660 = vadd.f32 %v1586, %v1659
    %v1661 = vpop.f32.mrf.mxu0
    %1662 = vdwg.mxu0
    %1663 = vmatprep.subr.mxu0 0.0
    %1664 = vmatpush1.msra.mxu0 0.0
    %1665 = vmatprep.subr.mxu0 0.0
    %1666 = vmatpush1.msra.mxu0 0.0
    %1667 = vmatprep.subr.mxu0 0.0
    %1668 = vmatpush1.msra.mxu0 0.0
    %1669 = vmatprep.subr.mxu0 0.0
    %1670 = vmatpush1.msra.mxu0 0.0
    %1671 = vmatprep.subr.mxu0 0.0
    %1672 = vmatpush1.msra.mxu0 0.0
    %1673 = vmatprep.subr.mxu0 0.0
    %1674 = vmatpush1.msra.mxu0 0.0
    %1675 = vmatprep.subr.mxu0 0.0
    %1676 = vmatpush1.msra.mxu0 0.0
    %1677 = vmatprep.subr.mxu0 0.0
    %1678 = vmatpush1.msra.mxu0 0.0
    %1679 = vmatprep.subr.mxu0 0.0
    %1680 = vmatpush1.msra.mxu0 0.0
    %1681 = vmatprep.subr.mxu0 0.0
    %1682 = vmatpush1.msra.mxu0 0.0
    %1683 = vmatprep.subr.mxu0 0.0
    %1684 = vmatpush1.msra.mxu0 0.0
    %1685 = vmatprep.subr.mxu0 0.0
    %1686 = vmatpush1.msra.mxu0 0.0
    %1687 = vmatprep.subr.mxu0 0.0
    %1688 = vmatpush1.msra.mxu0 %v1577
    %1689 = vmatprep.subr.mxu0 0.0
    %1690 = vmatpush1.msra.mxu0 %v1576
    %1691 = vmatprep.subr.mxu0 0.0
    %1692 = vmatpush1.msra.mxu0 %v1575
    %1693 = vmatprep.subr.mxu0 0.0
    %1694 = vmatpush1.msra.mxu0 %v1574
    %1695 = vmatprep.subr.mxu0 0.0
    %1696 = vmatpush2.msra.mxu0 0.0
    %1697 = vmatprep.subr.mxu0 0.0
    %1698 = vmatpush2.msra.mxu0 0.0
    %1699 = vmatprep.subr.mxu0 0.0
    %1700 = vmatpush2.msra.mxu0 0.0
    %1701 = vmatprep.subr.mxu0 0.0
    %1702 = vmatpush2.msra.mxu0 0.0
    %1703 = vmatprep.subr.mxu0 0.0
    %1704 = vmatpush2.msra.mxu0 0.0
    %1705 = vmatprep.subr.mxu0 0.0
    %1706 = vmatpush2.msra.mxu0 0.0
    %1707 = vmatprep.subr.mxu0 0.0
    %1708 = vmatpush2.msra.mxu0 0.0
    %1709 = vmatprep.subr.mxu0 0.0
    %1710 = vmatpush2.msra.mxu0 0.0
    %1711 = vmatprep.subr.mxu0 0.0
    %1712 = vmatpush2.msra.mxu0 0.0
    %1713 = vmatprep.subr.mxu0 0.0
    %1714 = vmatpush2.msra.mxu0 0.0
    %1715 = vmatprep.subr.mxu0 0.0
    %1716 = vmatpush2.msra.mxu0 0.0
    %1717 = vmatprep.subr.mxu0 0.0
    %1718 = vmatpush2.msra.mxu0 0.0
    %1719 = vmatprep.subr.mxu0 0.0
    %1720 = vmatpush2.msra.mxu0 0.0
    %1721 = vmatprep.subr.mxu0 0.0
    %1722 = vmatpush2.msra.mxu0 0.0
    %1723 = vmatprep.subr.mxu0 0.0
    %1724 = vmatpush2.msra.mxu0 0.0
    %1725 = vmatprep.subr.mxu0 0.0
    %1726 = vmatpush2.msra.mxu0 0.0
    %1727 = vmatprep.mubr.f32.mxu0 0.0
    %1728 = vmatmul.mubr.f32.gmra.mxu0 %v1153
    %v1729 = vpop.f32.mrf.mxu0
    %v1730 = vadd.f32 0.0, %v1729
    %v1731 = vpop.f32.mrf.mxu0
    %1732 = vdwg.mxu0
    %v1733 = vadd.f32 %v1660, %v1730
    %v1734 = vxor.u32 %v1733, 2147483648
    %v1735 = vmul.f32 %v1734, 1.442695
    %v1736 = vpow.pop %v1735
    %v1737 = vadd.f32 %v1736, 1.0
    %v1738 = vrcp.pop %v1737
    %v1739 = vmul.f32 1.0, %v1738
    %v1740 = vtanh.pop %v1733
    %v1741 = vmul.f32 %v1739, 0.0
    %1743 = vrot.lane.b32.xlu0 %v1740, 64
    %v1744 = vpop.permute.xlu0 %1743
    %v1746 = vmul.f32 %v1739, %v1744
    %1748 = vrot.lane.b32.xlu0 %v1746, 32
    %v1749 = vpop.permute.xlu0 %1748
    %v1751 = vadd.f32 %v1741, %v1749
    %v1752 = vtanh.pop %v1751
    %1754 = vrot.lane.b32.xlu0 %v1752, 64
    %v1755 = vpop.permute.xlu0 %1754
    %v1757 = vmul.f32 %v1739, %v1755
    %1759 = vrot.lane.b32.xlu0 %v1757, 32
    %v1760 = vpop.permute.xlu0 %1759
    %v1761 = vsel %vm1151, %v1760, 0
    %1763 = vmatprep.subr.mxu0 0.0
    %1764 = vmatpush1.msra.mxu0 0.0
    %1765 = vmatprep.subr.mxu0 0.0
    %1766 = vmatpush1.msra.mxu0 0.0
    %1767 = vmatprep.subr.mxu0 0.0
    %1768 = vmatpush1.msra.mxu0 0.0
    %1769 = vmatprep.subr.mxu0 0.0
    %1770 = vmatpush1.msra.mxu0 0.0
    %1771 = vmatprep.subr.mxu0 0.0
    %1772 = vmatpush1.msra.mxu0 0.0
    %1773 = vmatprep.subr.mxu0 0.0
    %1774 = vmatpush1.msra.mxu0 0.0
    %1775 = vmatprep.subr.mxu0 0.0
    %1776 = vmatpush1.msra.mxu0 0.0
    %1777 = vmatprep.subr.mxu0 0.0
    %1778 = vmatpush1.msra.mxu0 0.0
    %1779 = vmatprep.subr.mxu0 0.0
    %1780 = vmatpush1.msra.mxu0 0.0
    %1781 = vmatprep.subr.mxu0 0.0
    %1782 = vmatpush1.msra.mxu0 0.0
    %1783 = vmatprep.subr.mxu0 0.0
    %1784 = vmatpush1.msra.mxu0 0.0
    %1785 = vmatprep.subr.mxu0 0.0
    %1786 = vmatpush1.msra.mxu0 0.0
    %1787 = vmatprep.subr.mxu0 0.0
    %1788 = vmatpush1.msra.mxu0 %v1577
    %1789 = vmatprep.subr.mxu0 0.0
    %1790 = vmatpush1.msra.mxu0 %v1576
    %1791 = vmatprep.subr.mxu0 0.0
    %1792 = vmatpush1.msra.mxu0 %v1575
    %1793 = vmatprep.subr.mxu0 0.0
    %1794 = vmatpush1.msra.mxu0 %v1574
    %1795 = vmatprep.subr.mxu0 0.0
    %1796 = vmatpush2.msra.mxu0 0.0
    %1797 = vmatprep.subr.mxu0 0.0
    %1798 = vmatpush2.msra.mxu0 0.0
    %1799 = vmatprep.subr.mxu0 0.0
    %1800 = vmatpush2.msra.mxu0 0.0
    %1801 = vmatprep.subr.mxu0 0.0
    %1802 = vmatpush2.msra.mxu0 0.0
    %1803 = vmatprep.subr.mxu0 0.0
    %1804 = vmatpush2.msra.mxu0 0.0
    %1805 = vmatprep.subr.mxu0 0.0
    %1806 = vmatpush2.msra.mxu0 0.0
    %1807 = vmatprep.subr.mxu0 0.0
    %1808 = vmatpush2.msra.mxu0 0.0
    %1809 = vmatprep.subr.mxu0 0.0
    %1810 = vmatpush2.msra.mxu0 0.0
    %1811 = vmatprep.subr.mxu0 0.0
    %1812 = vmatpush2.msra.mxu0 0.0
    %1813 = vmatprep.subr.mxu0 0.0
    %1814 = vmatpush2.msra.mxu0 0.0
    %1815 = vmatprep.subr.mxu0 0.0
    %1816 = vmatpush2.msra.mxu0 0.0
    %1817 = vmatprep.subr.mxu0 0.0
    %1818 = vmatpush2.msra.mxu0 0.0
    %1819 = vmatprep.subr.mxu0 0.0
    %1820 = vmatpush2.msra.mxu0 0.0
    %1821 = vmatprep.subr.mxu0 0.0
    %1822 = vmatpush2.msra.mxu0 0.0
    %1823 = vmatprep.subr.mxu0 0.0
    %1824 = vmatpush2.msra.mxu0 0.0
    %1825 = vmatprep.subr.mxu0 0.0
    %1826 = vmatpush2.msra.mxu0 0.0
    %1827 = vmatprep.mubr.f32.mxu0 0.0
    %1828 = vmatmul.mubr.f32.gmra.mxu0 %v1761
    %v1829 = vpop.f32.mrf.mxu0
    %v1830 = vadd.f32 0.0, %v1829
    %v1831 = vpop.f32.mrf.mxu0
    %1832 = vdwg.mxu0
    %v1834 = vrot.slane %v1830, 6
    %v1836 = vadd.f32 %v1660, %v1834
    %v1837 = vxor.u32 %v1836, 2147483648
    %v1838 = vmul.f32 %v1837, 1.442695
    %v1839 = vpow.pop %v1838
    %v1840 = vadd.f32 %v1839, 1.0
    %v1841 = vrcp.pop %v1840
    %v1842 = vmul.f32 1.0, %v1841
    %v1843 = vtanh.pop %v1836
    %v1845 = vrot.slane %v1751, 6
    %v1847 = vmul.f32 %v1842, %v1845
    %1849 = vrot.lane.b32.xlu0 %v1843, 64
    %v1850 = vpop.permute.xlu0 %1849
    %v1852 = vmul.f32 %v1842, %v1850
    %1854 = vrot.lane.b32.xlu0 %v1852, 32
    %v1855 = vpop.permute.xlu0 %1854
    %v1857 = vadd.f32 %v1847, %v1855
    %v1858 = vtanh.pop %v1857
    %1860 = vrot.lane.b32.xlu0 %v1858, 64
    %v1861 = vpop.permute.xlu0 %1860
    %v1863 = vmul.f32 %v1842, %v1861
    %v1865 = vrot.slane %v1863, 2
    %1866 = vrot.lane.b32.xlu0 %v1865, 32
    %v1867 = vpop.permute.xlu0 %1866
    %v1868 = vsel %vm1151, %v1867, 0
    %1870 = vmatprep.subr.mxu0 0.0
    %1871 = vmatpush1.msra.mxu0 0.0
    %1872 = vmatprep.subr.mxu0 0.0
    %1873 = vmatpush1.msra.mxu0 0.0
    %1874 = vmatprep.subr.mxu0 0.0
    %1875 = vmatpush1.msra.mxu0 0.0
    %1876 = vmatprep.subr.mxu0 0.0
    %1877 = vmatpush1.msra.mxu0 0.0
    %1878 = vmatprep.subr.mxu0 0.0
    %1879 = vmatpush1.msra.mxu0 0.0
    %1880 = vmatprep.subr.mxu0 0.0
    %1881 = vmatpush1.msra.mxu0 0.0
    %1882 = vmatprep.subr.mxu0 0.0
    %1883 = vmatpush1.msra.mxu0 0.0
    %1884 = vmatprep.subr.mxu0 0.0
    %1885 = vmatpush1.msra.mxu0 0.0
    %1886 = vmatprep.subr.mxu0 0.0
    %1887 = vmatpush1.msra.mxu0 0.0
    %1888 = vmatprep.subr.mxu0 0.0
    %1889 = vmatpush1.msra.mxu0 0.0
    %1890 = vmatprep.subr.mxu0 0.0
    %1891 = vmatpush1.msra.mxu0 0.0
    %1892 = vmatprep.subr.mxu0 0.0
    %1893 = vmatpush1.msra.mxu0 0.0
    %1894 = vmatprep.subr.mxu0 0.0
    %1895 = vmatpush1.msra.mxu0 %v1577
    %1896 = vmatprep.subr.mxu0 0.0
    %1897 = vmatpush1.msra.mxu0 %v1576
    %1898 = vmatprep.subr.mxu0 0.0
    %1899 = vmatpush1.msra.mxu0 %v1575
    %1900 = vmatprep.subr.mxu0 0.0
    %1901 = vmatpush1.msra.mxu0 %v1574
    %1902 = vmatprep.subr.mxu0 0.0
    %1903 = vmatpush2.msra.mxu0 0.0
    %1904 = vmatprep.subr.mxu0 0.0
    %1905 = vmatpush2.msra.mxu0 0.0
    %1906 = vmatprep.subr.mxu0 0.0
    %1907 = vmatpush2.msra.mxu0 0.0
    %1908 = vmatprep.subr.mxu0 0.0
    %1909 = vmatpush2.msra.mxu0 0.0
    %1910 = vmatprep.subr.mxu0 0.0
    %1911 = vmatpush2.msra.mxu0 0.0
    %1912 = vmatprep.subr.mxu0 0.0
    %1913 = vmatpush2.msra.mxu0 0.0
    %1914 = vmatprep.subr.mxu0 0.0
    %1915 = vmatpush2.msra.mxu0 0.0
    %1916 = vmatprep.subr.mxu0 0.0
    %1917 = vmatpush2.msra.mxu0 0.0
    %1918 = vmatprep.subr.mxu0 0.0
    %1919 = vmatpush2.msra.mxu0 0.0
    %1920 = vmatprep.subr.mxu0 0.0
    %1921 = vmatpush2.msra.mxu0 0.0
    %1922 = vmatprep.subr.mxu0 0.0
    %1923 = vmatpush2.msra.mxu0 0.0
    %1924 = vmatprep.subr.mxu0 0.0
    %1925 = vmatpush2.msra.mxu0 0.0
    %1926 = vmatprep.subr.mxu0 0.0
    %1927 = vmatpush2.msra.mxu0 0.0
    %1928 = vmatprep.subr.mxu0 0.0
    %1929 = vmatpush2.msra.mxu0 0.0
    %1930 = vmatprep.subr.mxu0 0.0
    %1931 = vmatpush2.msra.mxu0 0.0
    %1932 = vmatprep.subr.mxu0 0.0
    %1933 = vmatpush2.msra.mxu0 0.0
    %1934 = vmatprep.mubr.f32.mxu0 0.0
    %1935 = vmatmul.mubr.f32.gmra.mxu0 %v1868
    %v1936 = vpop.f32.mrf.mxu0
    %v1937 = vadd.f32 0.0, %v1936
    %v1938 = vpop.f32.mrf.mxu0
    %1939 = vdwg.mxu0
    %v1941 = vrot.slane %v1937, 4
    %v1943 = vadd.f32 %v1660, %v1941
    %v1944 = vxor.u32 %v1943, 2147483648
    %v1945 = vmul.f32 %v1944, 1.442695
    %v1946 = vpow.pop %v1945
    %v1947 = vadd.f32 %v1946, 1.0
    %v1948 = vrcp.pop %v1947
    %v1949 = vmul.f32 1.0, %v1948
    %v1950 = vtanh.pop %v1943
    %v1952 = vrot.slane %v1857, 6
    %v1954 = vmul.f32 %v1949, %v1952
    %1956 = vrot.lane.b32.xlu0 %v1950, 64
    %v1957 = vpop.permute.xlu0 %1956
    %v1959 = vmul.f32 %v1949, %v1957
    %1961 = vrot.lane.b32.xlu0 %v1959, 32
    %v1962 = vpop.permute.xlu0 %1961
    %v1964 = vadd.f32 %v1954, %v1962
    %v1965 = vtanh.pop %v1964
    %1967 = vrot.lane.b32.xlu0 %v1965, 64
    %v1968 = vpop.permute.xlu0 %1967
    %v1970 = vmul.f32 %v1949, %v1968
    %v1972 = vrot.slane %v1970, 4
    %1973 = vrot.lane.b32.xlu0 %v1972, 32
    %v1974 = vpop.permute.xlu0 %1973
    %v1975 = vsel %vm1151, %v1974, 0
    %1977 = vmatprep.subr.mxu0 0.0
    %1978 = vmatpush1.msra.mxu0 0.0
    %1979 = vmatprep.subr.mxu0 0.0
    %1980 = vmatpush1.msra.mxu0 0.0
    %1981 = vmatprep.subr.mxu0 0.0
    %1982 = vmatpush1.msra.mxu0 0.0
    %1983 = vmatprep.subr.mxu0 0.0
    %1984 = vmatpush1.msra.mxu0 0.0
    %1985 = vmatprep.subr.mxu0 0.0
    %1986 = vmatpush1.msra.mxu0 0.0
    %1987 = vmatprep.subr.mxu0 0.0
    %1988 = vmatpush1.msra.mxu0 0.0
    %1989 = vmatprep.subr.mxu0 0.0
    %1990 = vmatpush1.msra.mxu0 0.0
    %1991 = vmatprep.subr.mxu0 0.0
    %1992 = vmatpush1.msra.mxu0 0.0
    %1993 = vmatprep.subr.mxu0 0.0
    %1994 = vmatpush1.msra.mxu0 0.0
    %1995 = vmatprep.subr.mxu0 0.0
    %1996 = vmatpush1.msra.mxu0 0.0
    %1997 = vmatprep.subr.mxu0 0.0
    %1998 = vmatpush1.msra.mxu0 0.0
    %1999 = vmatprep.subr.mxu0 0.0
    %2000 = vmatpush1.msra.mxu0 0.0
    %2001 = vmatprep.subr.mxu0 0.0
    %2002 = vmatpush1.msra.mxu0 %v1577
    %2003 = vmatprep.subr.mxu0 0.0
    %2004 = vmatpush1.msra.mxu0 %v1576
    %2005 = vmatprep.subr.mxu0 0.0
    %2006 = vmatpush1.msra.mxu0 %v1575
    %2007 = vmatprep.subr.mxu0 0.0
    %2008 = vmatpush1.msra.mxu0 %v1574
    %2009 = vmatprep.subr.mxu0 0.0
    %2010 = vmatpush2.msra.mxu0 0.0
    %2011 = vmatprep.subr.mxu0 0.0
    %2012 = vmatpush2.msra.mxu0 0.0
    %2013 = vmatprep.subr.mxu0 0.0
    %2014 = vmatpush2.msra.mxu0 0.0
    %2015 = vmatprep.subr.mxu0 0.0
    %2016 = vmatpush2.msra.mxu0 0.0
    %2017 = vmatprep.subr.mxu0 0.0
    %2018 = vmatpush2.msra.mxu0 0.0
    %2019 = vmatprep.subr.mxu0 0.0
    %2020 = vmatpush2.msra.mxu0 0.0
    %2021 = vmatprep.subr.mxu0 0.0
    %2022 = vmatpush2.msra.mxu0 0.0
    %2023 = vmatprep.subr.mxu0 0.0
    %2024 = vmatpush2.msra.mxu0 0.0
    %2025 = vmatprep.subr.mxu0 0.0
    %2026 = vmatpush2.msra.mxu0 0.0
    %2027 = vmatprep.subr.mxu0 0.0
    %2028 = vmatpush2.msra.mxu0 0.0
    %2029 = vmatprep.subr.mxu0 0.0
    %2030 = vmatpush2.msra.mxu0 0.0
    %2031 = vmatprep.subr.mxu0 0.0
    %2032 = vmatpush2.msra.mxu0 0.0
    %2033 = vmatprep.subr.mxu0 0.0
    %2034 = vmatpush2.msra.mxu0 0.0
    %2035 = vmatprep.subr.mxu0 0.0
    %2036 = vmatpush2.msra.mxu0 0.0
    %2037 = vmatprep.subr.mxu0 0.0
    %2038 = vmatpush2.msra.mxu0 0.0
    %2039 = vmatprep.subr.mxu0 0.0
    %2040 = vmatpush2.msra.mxu0 0.0
    %2041 = vmatprep.mubr.f32.mxu0 0.0
    %2042 = vmatmul.mubr.f32.gmra.mxu0 %v1975
    %v2043 = vpop.f32.mrf.mxu0
    %v2044 = vadd.f32 0.0, %v2043
    %v2045 = vpop.f32.mrf.mxu0
    %2046 = vdwg.mxu0
    %v2048 = vrot.slane %v2044, 2
    %v2050 = vadd.f32 %v1660, %v2048
    %v2051 = vxor.u32 %v2050, 2147483648
    %v2052 = vmul.f32 %v2051, 1.442695
    %v2053 = vpow.pop %v2052
    %v2054 = vadd.f32 %v2053, 1.0
    %v2055 = vrcp.pop %v2054
    %v2056 = vmul.f32 1.0, %v2055
    %v2057 = vtanh.pop %v2050
    %v2059 = vrot.slane %v1964, 6
    %v2061 = vmul.f32 %v2056, %v2059
    %2063 = vrot.lane.b32.xlu0 %v2057, 64
    %v2064 = vpop.permute.xlu0 %2063
    %v2066 = vmul.f32 %v2056, %v2064
    %2068 = vrot.lane.b32.xlu0 %v2066, 32
    %v2069 = vpop.permute.xlu0 %2068
    %v2071 = vadd.f32 %v2061, %v2069
    %v2072 = vtanh.pop %v2071
    %2074 = vrot.lane.b32.xlu0 %v2072, 64
    %v2075 = vpop.permute.xlu0 %2074
    %v2077 = vmul.f32 %v2056, %v2075
    %v2078 = vld [vmem:[#allocation16] sm:$0xff]
    %v2079 = vld [vmem:[#allocation16 + $0x8] sm:$0xff]
    %v2080 = vld [vmem:[#allocation16 + $0x10] sm:$0xff]
    %v2081 = vld [vmem:[#allocation16 + $0x18] sm:$0xff]
    %v2082 = vld [vmem:[#allocation17] sm:$0x1]
    %v2084 = vlaneseq
    %v2085 = vshrl.u32 %v2084, 7
    %v2086 = vsub.s32 0, %v2085
    %v2087 = vrot.slane %v2082, %v2086
    %v2090 = vrot.slane %v2077, 6
    %2091 = vrot.lane.b32.xlu0 %v2090, 32
    %v2092 = vpop.permute.xlu0 %2091
    %v2093 = vsel %vm1151, %v2092, 0
    %2095 = vmatprep.subr.mxu0 0.0
    %2096 = vmatpush1.msra.mxu0 0.0
    %2097 = vmatprep.subr.mxu0 0.0
    %2098 = vmatpush1.msra.mxu0 0.0
    %2099 = vmatprep.subr.mxu0 0.0
    %2100 = vmatpush1.msra.mxu0 0.0
    %2101 = vmatprep.subr.mxu0 0.0
    %2102 = vmatpush1.msra.mxu0 0.0
    %2103 = vmatprep.subr.mxu0 0.0
    %2104 = vmatpush1.msra.mxu0 0.0
    %2105 = vmatprep.subr.mxu0 0.0
    %2106 = vmatpush1.msra.mxu0 0.0
    %2107 = vmatprep.subr.mxu0 0.0
    %2108 = vmatpush1.msra.mxu0 0.0
    %2109 = vmatprep.subr.mxu0 0.0
    %2110 = vmatpush1.msra.mxu0 0.0
    %2111 = vmatprep.subr.mxu0 0.0
    %2112 = vmatpush1.msra.mxu0 0.0
    %2113 = vmatprep.subr.mxu0 0.0
    %2114 = vmatpush1.msra.mxu0 0.0
    %2115 = vmatprep.subr.mxu0 0.0
    %2116 = vmatpush1.msra.mxu0 0.0
    %2117 = vmatprep.subr.mxu0 0.0
    %2118 = vmatpush1.msra.mxu0 0.0
    %2119 = vmatprep.subr.mxu0 0.0
    %2120 = vmatpush1.msra.mxu0 %v2081
    %2121 = vmatprep.subr.mxu0 0.0
    %2122 = vmatpush1.msra.mxu0 %v2080
    %2123 = vmatprep.subr.mxu0 0.0
    %2124 = vmatpush1.msra.mxu0 %v2079
    %2125 = vmatprep.subr.mxu0 0.0
    %2126 = vmatpush1.msra.mxu0 %v2078
    %2127 = vmatprep.subr.mxu0 0.0
    %2128 = vmatpush2.msra.mxu0 0.0
    %2129 = vmatprep.subr.mxu0 0.0
    %2130 = vmatpush2.msra.mxu0 0.0
    %2131 = vmatprep.subr.mxu0 0.0
    %2132 = vmatpush2.msra.mxu0 0.0
    %2133 = vmatprep.subr.mxu0 0.0
    %2134 = vmatpush2.msra.mxu0 0.0
    %2135 = vmatprep.subr.mxu0 0.0
    %2136 = vmatpush2.msra.mxu0 0.0
    %2137 = vmatprep.subr.mxu0 0.0
    %2138 = vmatpush2.msra.mxu0 0.0
    %2139 = vmatprep.subr.mxu0 0.0
    %2140 = vmatpush2.msra.mxu0 0.0
    %2141 = vmatprep.subr.mxu0 0.0
    %2142 = vmatpush2.msra.mxu0 0.0
    %2143 = vmatprep.subr.mxu0 0.0
    %2144 = vmatpush2.msra.mxu0 0.0
    %2145 = vmatprep.subr.mxu0 0.0
    %2146 = vmatpush2.msra.mxu0 0.0
    %2147 = vmatprep.subr.mxu0 0.0
    %2148 = vmatpush2.msra.mxu0 0.0
    %2149 = vmatprep.subr.mxu0 0.0
    %2150 = vmatpush2.msra.mxu0 0.0
    %2151 = vmatprep.subr.mxu0 0.0
    %2152 = vmatpush2.msra.mxu0 0.0
    %2153 = vmatprep.subr.mxu0 0.0
    %2154 = vmatpush2.msra.mxu0 0.0
    %2155 = vmatprep.subr.mxu0 0.0
    %2156 = vmatpush2.msra.mxu0 0.0
    %2157 = vmatprep.subr.mxu0 0.0
    %2158 = vmatpush2.msra.mxu0 0.0
    %2159 = vmatprep.mubr.f32.mxu0 0.0
    %2160 = vmatmul.mubr.f32.gmra.mxu0 %v2093
    %v2161 = vpop.f32.mrf.mxu0
    %v2162 = vadd.f32 %v2087, %v2161
    %v2163 = vpop.f32.mrf.mxu0
    %2164 = vdwg.mxu0
    %v2165 = vmax.f32 %v2162, 0.0
    %v2166 = vld [vmem:[%s13] sm:$0xff]
    %v2167 = vld [vmem:[%s13 + $0x8] sm:$0xff]
    %v2168 = vld [vmem:[%s13 + $0x10] sm:$0xff]
    %v2169 = vld [vmem:[%s13 + $0x18] sm:$0xff]
    %v2170 = vld [vmem:[%s13 + $0x20] sm:$0xff]
    %v2171 = vld [vmem:[%s13 + $0x28] sm:$0xff]
    %v2172 = vld [vmem:[%s13 + $0x30] sm:$0xff]
    %v2173 = vld [vmem:[%s13 + $0x38] sm:$0xff]
    %v2174 = vld [vmem:[#allocation19] sm:$0x1]
    %v2176 = vlaneseq
    %v2177 = vshrl.u32 %v2176, 7
    %v2178 = vsub.s32 0, %v2177
    %v2179 = vrot.slane %v2174, %v2178
    %v2182 = vsel %vm818, %v2165, 0
    %2184 = vmatprep.subr.mxu0 0.0
    %2185 = vmatpush1.msra.mxu0 0.0
    %2186 = vmatprep.subr.mxu0 0.0
    %2187 = vmatpush1.msra.mxu0 0.0
    %2188 = vmatprep.subr.mxu0 0.0
    %2189 = vmatpush1.msra.mxu0 0.0
    %2190 = vmatprep.subr.mxu0 0.0
    %2191 = vmatpush1.msra.mxu0 0.0
    %2192 = vmatprep.subr.mxu0 0.0
    %2193 = vmatpush1.msra.mxu0 0.0
    %2194 = vmatprep.subr.mxu0 0.0
    %2195 = vmatpush1.msra.mxu0 0.0
    %2196 = vmatprep.subr.mxu0 0.0
    %2197 = vmatpush1.msra.mxu0 0.0
    %2198 = vmatprep.subr.mxu0 0.0
    %2199 = vmatpush1.msra.mxu0 0.0
    %2200 = vmatprep.subr.mxu0 0.0
    %2201 = vmatpush1.msra.mxu0 %v2173
    %2202 = vmatprep.subr.mxu0 0.0
    %2203 = vmatpush1.msra.mxu0 %v2172
    %2204 = vmatprep.subr.mxu0 0.0
    %2205 = vmatpush1.msra.mxu0 %v2171
    %2206 = vmatprep.subr.mxu0 0.0
    %2207 = vmatpush1.msra.mxu0 %v2170
    %2208 = vmatprep.subr.mxu0 0.0
    %2209 = vmatpush1.msra.mxu0 %v2169
    %2210 = vmatprep.subr.mxu0 0.0
    %2211 = vmatpush1.msra.mxu0 %v2168
    %2212 = vmatprep.subr.mxu0 0.0
    %2213 = vmatpush1.msra.mxu0 %v2167
    %2214 = vmatprep.subr.mxu0 0.0
    %2215 = vmatpush1.msra.mxu0 %v2166
    %2216 = vmatprep.subr.mxu0 0.0
    %2217 = vmatpush2.msra.mxu0 0.0
    %2218 = vmatprep.subr.mxu0 0.0
    %2219 = vmatpush2.msra.mxu0 0.0
    %2220 = vmatprep.subr.mxu0 0.0
    %2221 = vmatpush2.msra.mxu0 0.0
    %2222 = vmatprep.subr.mxu0 0.0
    %2223 = vmatpush2.msra.mxu0 0.0
    %2224 = vmatprep.subr.mxu0 0.0
    %2225 = vmatpush2.msra.mxu0 0.0
    %2226 = vmatprep.subr.mxu0 0.0
    %2227 = vmatpush2.msra.mxu0 0.0
    %2228 = vmatprep.subr.mxu0 0.0
    %2229 = vmatpush2.msra.mxu0 0.0
    %2230 = vmatprep.subr.mxu0 0.0
    %2231 = vmatpush2.msra.mxu0 0.0
    %2232 = vmatprep.subr.mxu0 0.0
    %2233 = vmatpush2.msra.mxu0 0.0
    %2234 = vmatprep.subr.mxu0 0.0
    %2235 = vmatpush2.msra.mxu0 0.0
    %2236 = vmatprep.subr.mxu0 0.0
    %2237 = vmatpush2.msra.mxu0 0.0
    %2238 = vmatprep.subr.mxu0 0.0
    %2239 = vmatpush2.msra.mxu0 0.0
    %2240 = vmatprep.subr.mxu0 0.0
    %2241 = vmatpush2.msra.mxu0 0.0
    %2242 = vmatprep.subr.mxu0 0.0
    %2243 = vmatpush2.msra.mxu0 0.0
    %2244 = vmatprep.subr.mxu0 0.0
    %2245 = vmatpush2.msra.mxu0 0.0
    %2246 = vmatprep.subr.mxu0 0.0
    %2247 = vmatpush2.msra.mxu0 0.0
    %2248 = vmatprep.mubr.f32.mxu0 0.0
    %2249 = vmatmul.mubr.f32.gmra.mxu0 %v2182
    %v2250 = vpop.f32.mrf.mxu0
    %v2251 = vadd.f32 %v2179, %v2250
    %v2252 = vpop.f32.mrf.mxu0
    %2253 = vdwg.mxu0
    %vm2254 = vcmask 58368
    %2255 = vst.msk [vmem:[#allocation20] sm:$0x3] %vm2254, %v2251
    // Predicated region
    $region106: #{_lambda_.1} parent=1 // pred_check
      _
    $region107: #{_lambda_.1} parent=1 // pred_check_branch
      %2257 = sbr.rel (0) target = $region109
    $region108: #{_lambda_.1} parent=1 // pred_region
      %s2259 = ssub.s32 32, 32
      %2260 = vsyncadd [#allocation4], %s2259
      %s2262 = sshll.u32 [#allocation20], 4
      %s2263 = int_to_ptr.vmem [resolvable:$true] %s2262
      %2265 = dma.vmem_to_hbm [thread:$0]  %s2263, 32, %s15, [#allocation4]
    $region109: #{_lambda_.1} parent=1 // pred_fallthru
      _
    // Predicated region
    $region110: #{_lambda_.1} parent=1 // pred_check
      _
    $region111: #{_lambda_.1} parent=1 // pred_check_branch
      %2267 = sbr.rel (0) target = $region113
    $region112: #{_lambda_.1} parent=1 // pred_region
      %2268 = dma.done [#allocation4], 32
    $region113: #{_lambda_.1} parent=1 // pred_fallthru
      _
    %2269 = vsyncpa [#allocation3], 1
    %2270 = vsyncpa [#allocation6], 1
    %2271 = vsyncpa [#allocation9], 1
    %2272 = vsyncpa [#allocation12], 1
    %2273 = vsyncpa [#allocation15], 1
    %2274 = vsyncpa [#allocation18], 1
    %2275 = vsyncpa [#allocation4], 1

</llo_original>
